<compile_context>
chip_gen: v6e
topology: v6e:2x2x1
jax: 0.10.0
libtpu: 0.0.40
codegen_flags: <defaults>
</compile_context>

<pallas_src>
import functools

import numpy as np
import jax
import jax.numpy as jnp
from jax.experimental import pallas as pl
from jax.experimental.pallas import tpu as pltpu


# --------------------------------------------------------------------------
# Kernel
# --------------------------------------------------------------------------
def _mri_subsample_kernel(x_ref, m_ref, hm_ref, wm_ref,
                          samp_ref, kre_ref, kim_ref,
                          *, h, L, mask_rows, mask_value, mm_dtype):
    f32 = jnp.float32

    def dot(a, b):
        return jnp.dot(a.astype(mm_dtype), b.astype(mm_dtype),
                       preferred_element_type=f32)

    x = x_ref[...]                                   # (h, L) real, lane-dense

    # Packed constant DFT matrices (row-stacked, sublane-aligned slices).
    a_re = hm_ref[0 * h:1 * h, :]                    # fftshift_h . F_h
    a_im = hm_ref[1 * h:2 * h, :]
    c_re = hm_ref[2 * h:3 * h, :]                    # (1/H) conj(F_h) . ifftshift_h
    c_im = hm_ref[3 * h:4 * h, :]
    b_re = wm_ref[0 * L:1 * L, :]                    # block-diag W-side FFT (right)
    b_im = wm_ref[1 * L:2 * L, :]
    d_re = wm_ref[2 * L:3 * L, :]                    # block-diag W-side IFFT (right)
    d_im = wm_ref[3 * L:4 * L, :]

    # ---- H-side FFT (x is real): T = A @ X ---------------------------------
    t_re = dot(a_re, x)
    t_im = dot(a_im, x)

    # ---- W-side FFT: K = T @ B_blockdiag  (4-mult complex form) -------------
    k_re = dot(t_re, b_re) - dot(t_im, b_im)
    k_im = dot(t_re, b_im) + dot(t_im, b_re)
    kre_ref[...] = k_re
    kim_ref[...] = k_im

    # ---- mask in shifted k-space (mask may be a broadcast column mask) ------
    if mask_rows == h:
        m = m_ref[...]
    else:
        m = jnp.broadcast_to(m_ref[0:1, :], (h, L))
    mk_re = k_re * m
    mk_im = k_im * m
    if mask_value != 0.0:                            # static: usually elided
        mk_re = mk_re + (1.0 - m) * mask_value

    # ---- W-side IFFT: U = MK @ D_blockdiag -----------------------------------
    u_re = dot(mk_re, d_re) - dot(mk_im, d_im)
    u_im = dot(mk_re, d_im) + dot(mk_im, d_re)

    # ---- H-side IFFT: Y = C @ U, then magnitude ------------------------------
    y_re = dot(c_re, u_re) - dot(c_im, u_im)
    y_im = dot(c_re, u_im) + dot(c_im, u_re)
    samp_ref[...] = jnp.sqrt(y_re * y_re + y_im * y_im)


# --------------------------------------------------------------------------
# Host-side helpers
# --------------------------------------------------------------------------
def _dft_matrix(n):
    j = np.arange(n)
    ang = -2.0 * np.pi * np.outer(j, j) / n
    return np.cos(ang) + 1j * np.sin(ang)


def _transform_matrices(h, w, n_img, dtype):
    """Packed DFT matrices with the fft/ifft shifts folded in.

    Returns:
      hmats: (4h, h)  rows = [A.re | A.im | C.re | C.im]   (left-multipliers)
      wmats: (4L, L)  rows = [B.re | B.im | D.re | D.im]   (right-multipliers,
             block-diagonal over the n_img images packed along the lane axis)
    """
    Fh = _dft_matrix(h)
    Fw = _dft_matrix(w)
    A = np.roll(Fh, h // 2, axis=0)                    # fftshift_h . F_h
    C = np.roll(np.conj(Fh), h // 2, axis=1) / h       # (1/H) conj(F_h) . ifftshift_h
    Bm = np.roll(Fw, w // 2, axis=0).T                 # (fftshift_w . F_w)^T
    Dm = (np.roll(np.conj(Fw), w // 2, axis=1) / w).T  # W-side IFFT, right-mult
    eye = np.eye(n_img)
    Bbd = np.kron(eye, Bm)
    Dbd = np.kron(eye, Dm)
    hmats = np.concatenate([A.real, A.imag, C.real, C.imag], axis=0)
    wmats = np.concatenate([Bbd.real, Bbd.imag, Dbd.real, Dbd.imag], axis=0)
    return jnp.asarray(hmats, dtype), jnp.asarray(wmats, dtype)


def _vmem_capacity_bytes():
    """Physical VMEM per TensorCore; conservative (v7x) fallback if query fails."""
    try:
        info = pltpu.get_tpu_info()
        cap = getattr(info, "vmem_capacity_bytes", None)
        if cap:
            return int(cap)
    except Exception:
        pass
    return 64 * 1024 * 1024


def _choose_n_img(bc, h, w, mask_rows, budget_bytes):
    """Images packed per block: lane-dense first, then v7x-friendly grid, then size."""
    divisors = [d for d in range(1, bc + 1) if bc % d == 0]
    if h % 8 != 0:
        # Block sublane dim must equal the full dim if it is not 8-divisible.
        divisors = [bc]

    def blk_bytes(d):
        L = d * w
        io = 2 * (h * L + mask_rows * L + 3 * h * L) * 4   # double-buffered blocks
        const = 2 * (4 * h * h + 4 * L * L) * 4            # packed DFT matrices
        live = 12 * h * L * 4                              # complex intermediates
        return io + const + live

    fitting = [d for d in divisors if blk_bytes(d) <= budget_bytes]
    if not fitting:
        return min(divisors)
    dense = [d for d in fitting if d * w >= 128] or fitting   # >=128 lanes
    multi = [d for d in dense if bc // d >= 2] or dense       # >=2 grid steps (v7x)
    return max(multi)


# --------------------------------------------------------------------------
# Wrapper (matches MRISubsample.apply_mask semantics)
# --------------------------------------------------------------------------
def mri_subsample_apply_mask(x, mask, mask_value=0.0, mxu_dtype=jnp.float32):
    """x: (B, C, H, W) real.  mask: broadcastable to (B, C, H, W).

    Returns dict(sample, mask, k_space, masked_k_space) matching the PyTorch
    MRISubsample.apply_mask (torch fftshift/ifftshift with dim=None, i.e. the
    shifts also roll the batch/channel axes)."""
    b, c, h, w = x.shape
    bc = b * c
    sb, sc = b // 2, c // 2

    mask = jnp.asarray(mask, jnp.float32)
    compact_mask = mask.ndim == 4 and mask.shape[2] == 1   # constant over H (cartesian)
    mask_rows = 8 if compact_mask else h

    vmem_cap = _vmem_capacity_bytes()
    vmem_limit = min(vmem_cap * 3 // 4, 96 * 1024 * 1024)
    n_img = _choose_n_img(bc, h, w, mask_rows, vmem_limit)
    n_blk = bc // n_img
    L = n_img * w

    # torch fftshift(dim=None) also rolls batch/channel: iterate in k-space slot
    # order so k_space needs no roll and only the sample plane is rolled back.
    # TODO(synk): folding these two rolls into the kernel would require per-image
    # gather index maps, which conflicts with multi-image lane-dense blocks.
    x_perm = jnp.roll(x.astype(jnp.float32), shift=(sb, sc), axis=(0, 1))

    def to_lane_dense(t):       # (B,C,H,W) -> (n_blk*h, n_img*w), images along lanes
        return (t.reshape(n_blk, n_img, h, w)
                 .transpose(0, 2, 1, 3)
                 .reshape(n_blk * h, L))

    def from_lane_dense(t):     # inverse layout plumbing
        return (t.reshape(n_blk, h, n_img, w)
                 .transpose(0, 2, 1, 3)
                 .reshape(b, c, h, w))

    x2 = to_lane_dense(x_perm)
    if compact_mask:
        mcol = jnp.broadcast_to(mask, (b, c, 1, w)).reshape(n_blk, L)
        m2 = jnp.broadcast_to(mcol[:, None, :], (n_blk, 8, L)).reshape(n_blk * 8, L)
    else:
        m2 = to_lane_dense(jnp.broadcast_to(mask, (b, c, h, w)))

    hmats, wmats = _transform_matrices(h, w, n_img, mxu_dtype)

    img_spec = pl.BlockSpec((h, L), lambda j: (j, 0))
    msk_spec = pl.BlockSpec((mask_rows, L), lambda j: (j, 0))
    hmat_spec = pl.BlockSpec((4 * h, h), lambda j: (0, 0))
    wmat_spec = pl.BlockSpec((4 * L, L), lambda j: (0, 0))
    out_shapes = tuple(jax.ShapeDtypeStruct((n_blk * h, L), jnp.float32)
                       for _ in range(3))

    kernel = functools.partial(
        _mri_subsample_kernel, h=h, L=L, mask_rows=mask_rows,
        mask_value=float(mask_value), mm_dtype=mxu_dtype)

    samp2, kre2, kim2 = pl.pallas_call(
        kernel,
        out_shape=out_shapes,
        grid_spec=pltpu.PrefetchScalarGridSpec(
            num_scalar_prefetch=0,
            grid=(n_blk,),
            in_specs=[img_spec, msk_spec, hmat_spec, wmat_spec],
            out_specs=[img_spec] * 3),
        compiler_params=pltpu.CompilerParams(
            dimension_semantics=("parallel",),
            vmem_limit_bytes=vmem_limit),
    )(x2, m2, hmats, wmats)

    k_space = jax.lax.complex(from_lane_dense(kre2), from_lane_dense(kim2))
    masked_k_space = k_space * mask + (1.0 - mask) * mask_value
    sample = jnp.roll(from_lane_dense(samp2), shift=(-sb, -sc), axis=(0, 1))
    return dict(sample=sample, mask=mask, k_space=k_space,
                masked_k_space=masked_k_space)


# --------------------------------------------------------------------------
# Mask construction (cartesian mode of MRISubsample.forward)
# --------------------------------------------------------------------------
def cartesian_k_space_mask(b, c, h, w, keep_n_cols, center_width, rng):
    # TODO(synk): the exact RNG sequence of the original cartesian_k_space_mask
    # helper is not reproducible from the spec; only its column-mask semantics
    # (random kept columns + preserved center band, shared across C and H) is kept.
    mask = np.zeros((b, 1, 1, w), np.float32)
    lo = w // 2 - center_width // 2
    center_cols = np.arange(lo, lo + center_width)
    for i in range(b):
        cols = rng.choice(w, size=int(keep_n_cols[i]), replace=False)
        mask[i, 0, 0, cols] = 1.0
        mask[i, 0, 0, center_cols] = 1.0
    return jnp.asarray(mask, jnp.float32)


if __name__ == "__main__":
    keep_min, keep_max, preserve_center = 4, 8, 2
    b, c, h, w = 2, 4, 16, 16

    key = jax.random.PRNGKey(0)
    x = jax.random.normal(key, (b, c, h, w), dtype=jnp.float32)

    rng = np.random.default_rng(0)
    keep = rng.integers(keep_min, keep_max + 1, size=(b,))
    mask = cartesian_k_space_mask(b, c, h, w, keep, preserve_center, rng)

    out = mri_subsample_apply_mask(x, mask)
    jax.block_until_ready(out)

    # pure-JAX reference reproducing torch semantics (fftshift over all dims)
    k_ref = jnp.fft.fftshift(jnp.fft.fft2(x))
    mk_ref = k_ref * mask
    samp_ref = jnp.abs(jnp.fft.ifft2(jnp.fft.ifftshift(mk_ref)))

    assert jnp.allclose(out["sample"], samp_ref, atol=1e-3, rtol=1e-3)
    assert jnp.allclose(out["k_space"], k_ref, atol=5e-2, rtol=1e-3)
    assert jnp.allclose(out["masked_k_space"], mk_ref, atol=5e-2, rtol=1e-3)

    print("KERNEL_OK")
</pallas_src>

<mosaic_0001>
module attributes {stable_mosaic.version = 11 : i64} {
  func.func @_mri_subsample_kernel(%arg0: i32, %arg1: memref<16x128xf32, #tpu.memory_space<vmem>>, %arg2: memref<8x128xf32, #tpu.memory_space<vmem>>, %arg3: memref<64x16xf32, #tpu.memory_space<vmem>>, %arg4: memref<512x128xf32, #tpu.memory_space<vmem>>, %arg5: memref<16x128xf32, #tpu.memory_space<vmem>>, %arg6: memref<16x128xf32, #tpu.memory_space<vmem>>, %arg7: memref<16x128xf32, #tpu.memory_space<vmem>>) attributes {dimension_semantics = [#tpu.dimension_semantics<parallel>], iteration_bounds = array<i64: 1>, scalar_prefetch = 0 : i64, scratch_operands = 0 : i64, tpu.core_type = #tpu.core_type<tc>, window_params = [{transform_indices = @transform_0, window_bounds = array<i64: 16, 128>}, {transform_indices = @transform_1, window_bounds = array<i64: 8, 128>}, {pipeline_mode = #tpu.pipeline_mode<synchronous>, transform_indices = @transform_2, window_bounds = array<i64: 64, 16>}, {pipeline_mode = #tpu.pipeline_mode<synchronous>, transform_indices = @transform_3, window_bounds = array<i64: 512, 128>}, {transform_indices = @transform_4, window_bounds = array<i64: 16, 128>}, {transform_indices = @transform_5, window_bounds = array<i64: 16, 128>}, {transform_indices = @transform_6, window_bounds = array<i64: 16, 128>}]} {
    %c0 = arith.constant 0 : index
    %c0_0 = arith.constant 0 : index
    %0 = vector.load %arg1[%c0, %c0_0] : memref<16x128xf32, #tpu.memory_space<vmem>>, vector<16x128xf32>
    %c0_1 = arith.constant 0 : index
    %c0_2 = arith.constant 0 : index
    %1 = vector.load %arg3[%c0_1, %c0_2] : memref<64x16xf32, #tpu.memory_space<vmem>>, vector<16x16xf32>
    %c16 = arith.constant 16 : index
    %c0_3 = arith.constant 0 : index
    %2 = vector.load %arg3[%c16, %c0_3] : memref<64x16xf32, #tpu.memory_space<vmem>>, vector<16x16xf32>
    %c32 = arith.constant 32 : index
    %c0_4 = arith.constant 0 : index
    %3 = vector.load %arg3[%c32, %c0_4] : memref<64x16xf32, #tpu.memory_space<vmem>>, vector<16x16xf32>
    %c48 = arith.constant 48 : index
    %c0_5 = arith.constant 0 : index
    %4 = vector.load %arg3[%c48, %c0_5] : memref<64x16xf32, #tpu.memory_space<vmem>>, vector<16x16xf32>
    %c0_6 = arith.constant 0 : index
    %c0_7 = arith.constant 0 : index
    %5 = vector.load %arg4[%c0_6, %c0_7] : memref<512x128xf32, #tpu.memory_space<vmem>>, vector<128x128xf32>
    %c128 = arith.constant 128 : index
    %c0_8 = arith.constant 0 : index
    %6 = vector.load %arg4[%c128, %c0_8] : memref<512x128xf32, #tpu.memory_space<vmem>>, vector<128x128xf32>
    %c256 = arith.constant 256 : index
    %c0_9 = arith.constant 0 : index
    %7 = vector.load %arg4[%c256, %c0_9] : memref<512x128xf32, #tpu.memory_space<vmem>>, vector<128x128xf32>
    %c384 = arith.constant 384 : index
    %c0_10 = arith.constant 0 : index
    %8 = vector.load %arg4[%c384, %c0_10] : memref<512x128xf32, #tpu.memory_space<vmem>>, vector<128x128xf32>
    %cst = arith.constant dense<0.000000e+00> : vector<16x128xf32>
    %9 = tpu.matmul %1, %0, %cst {dimension_numbers = #tpu.dot_dimension_numbers<[1], [0], [0], [1], [0, 0, 1, 1], [], []>} : vector<16x16xf32>, vector<16x128xf32>, vector<16x128xf32> -> vector<16x128xf32>
    %cst_11 = arith.constant dense<0.000000e+00> : vector<16x128xf32>
    %10 = tpu.matmul %2, %0, %cst_11 {dimension_numbers = #tpu.dot_dimension_numbers<[1], [0], [0], [1], [0, 0, 1, 1], [], []>} : vector<16x16xf32>, vector<16x128xf32>, vector<16x128xf32> -> vector<16x128xf32>
    %cst_12 = arith.constant dense<0.000000e+00> : vector<16x128xf32>
    %11 = tpu.matmul %9, %5, %cst_12 {dimension_numbers = #tpu.dot_dimension_numbers<[1], [0], [0], [1], [0, 0, 1, 1], [], []>} : vector<16x128xf32>, vector<128x128xf32>, vector<16x128xf32> -> vector<16x128xf32>
    %cst_13 = arith.constant dense<0.000000e+00> : vector<16x128xf32>
    %12 = tpu.matmul %10, %6, %cst_13 {dimension_numbers = #tpu.dot_dimension_numbers<[1], [0], [0], [1], [0, 0, 1, 1], [], []>} : vector<16x128xf32>, vector<128x128xf32>, vector<16x128xf32> -> vector<16x128xf32>
    %13 = arith.subf %11, %12 : vector<16x128xf32>
    %cst_14 = arith.constant dense<0.000000e+00> : vector<16x128xf32>
    %14 = tpu.matmul %9, %6, %cst_14 {dimension_numbers = #tpu.dot_dimension_numbers<[1], [0], [0], [1], [0, 0, 1, 1], [], []>} : vector<16x128xf32>, vector<128x128xf32>, vector<16x128xf32> -> vector<16x128xf32>
    %cst_15 = arith.constant dense<0.000000e+00> : vector<16x128xf32>
    %15 = tpu.matmul %10, %5, %cst_15 {dimension_numbers = #tpu.dot_dimension_numbers<[1], [0], [0], [1], [0, 0, 1, 1], [], []>} : vector<16x128xf32>, vector<128x128xf32>, vector<16x128xf32> -> vector<16x128xf32>
    %16 = arith.addf %14, %15 : vector<16x128xf32>
    %c0_16 = arith.constant 0 : index
    %c0_17 = arith.constant 0 : index
    %17 = vector.load %arg6[%c0_16, %c0_17] : memref<16x128xf32, #tpu.memory_space<vmem>>, vector<16x128xf32>
    tpu.vector_store %arg6[%c0_16, %c0_17], %13 {strides = array<i32>} : memref<16x128xf32, #tpu.memory_space<vmem>>, vector<16x128xf32>,
    %c0_18 = arith.constant 0 : index
    %c0_19 = arith.constant 0 : index
    %18 = vector.load %arg7[%c0_18, %c0_19] : memref<16x128xf32, #tpu.memory_space<vmem>>, vector<16x128xf32>
    tpu.vector_store %arg7[%c0_18, %c0_19], %16 {strides = array<i32>} : memref<16x128xf32, #tpu.memory_space<vmem>>, vector<16x128xf32>,
    %c0_20 = arith.constant 0 : index
    %c0_21 = arith.constant 0 : index
    %19 = vector.load %arg2[%c0_20, %c0_21] : memref<8x128xf32, #tpu.memory_space<vmem>>, vector<1x128xf32>
    %20 = vector.shape_cast %19 : vector<1x128xf32> to vector<1x128xf32>
    %21 = vector.broadcast %20 : vector<1x128xf32> to vector<16x128xf32>
    %22 = arith.mulf %13, %21 : vector<16x128xf32>
    %23 = arith.mulf %16, %21 : vector<16x128xf32>
    %cst_22 = arith.constant dense<0.000000e+00> : vector<16x128xf32>
    %24 = tpu.matmul %22, %7, %cst_22 {dimension_numbers = #tpu.dot_dimension_numbers<[1], [0], [0], [1], [0, 0, 1, 1], [], []>} : vector<16x128xf32>, vector<128x128xf32>, vector<16x128xf32> -> vector<16x128xf32>
    %cst_23 = arith.constant dense<0.000000e+00> : vector<16x128xf32>
    %25 = tpu.matmul %23, %8, %cst_23 {dimension_numbers = #tpu.dot_dimension_numbers<[1], [0], [0], [1], [0, 0, 1, 1], [], []>} : vector<16x128xf32>, vector<128x128xf32>, vector<16x128xf32> -> vector<16x128xf32>
    %26 = arith.subf %24, %25 : vector<16x128xf32>
    %cst_24 = arith.constant dense<0.000000e+00> : vector<16x128xf32>
    %27 = tpu.matmul %22, %8, %cst_24 {dimension_numbers = #tpu.dot_dimension_numbers<[1], [0], [0], [1], [0, 0, 1, 1], [], []>} : vector<16x128xf32>, vector<128x128xf32>, vector<16x128xf32> -> vector<16x128xf32>
    %cst_25 = arith.constant dense<0.000000e+00> : vector<16x128xf32>
    %28 = tpu.matmul %23, %7, %cst_25 {dimension_numbers = #tpu.dot_dimension_numbers<[1], [0], [0], [1], [0, 0, 1, 1], [], []>} : vector<16x128xf32>, vector<128x128xf32>, vector<16x128xf32> -> vector<16x128xf32>
    %29 = arith.addf %27, %28 : vector<16x128xf32>
    %cst_26 = arith.constant dense<0.000000e+00> : vector<16x128xf32>
    %30 = tpu.matmul %3, %26, %cst_26 {dimension_numbers = #tpu.dot_dimension_numbers<[1], [0], [0], [1], [0, 0, 1, 1], [], []>} : vector<16x16xf32>, vector<16x128xf32>, vector<16x128xf32> -> vector<16x128xf32>
    %cst_27 = arith.constant dense<0.000000e+00> : vector<16x128xf32>
    %31 = tpu.matmul %4, %29, %cst_27 {dimension_numbers = #tpu.dot_dimension_numbers<[1], [0], [0], [1], [0, 0, 1, 1], [], []>} : vector<16x16xf32>, vector<16x128xf32>, vector<16x128xf32> -> vector<16x128xf32>
    %32 = arith.subf %30, %31 : vector<16x128xf32>
    %cst_28 = arith.constant dense<0.000000e+00> : vector<16x128xf32>
    %33 = tpu.matmul %3, %29, %cst_28 {dimension_numbers = #tpu.dot_dimension_numbers<[1], [0], [0], [1], [0, 0, 1, 1], [], []>} : vector<16x16xf32>, vector<16x128xf32>, vector<16x128xf32> -> vector<16x128xf32>
    %cst_29 = arith.constant dense<0.000000e+00> : vector<16x128xf32>
    %34 = tpu.matmul %4, %26, %cst_29 {dimension_numbers = #tpu.dot_dimension_numbers<[1], [0], [0], [1], [0, 0, 1, 1], [], []>} : vector<16x16xf32>, vector<16x128xf32>, vector<16x128xf32> -> vector<16x128xf32>
    %35 = arith.addf %33, %34 : vector<16x128xf32>
    %36 = arith.mulf %32, %32 : vector<16x128xf32>
    %37 = arith.mulf %35, %35 : vector<16x128xf32>
    %38 = arith.addf %36, %37 : vector<16x128xf32>
    %39 = math.sqrt %38 : vector<16x128xf32>
    %c0_30 = arith.constant 0 : index
    %c0_31 = arith.constant 0 : index
    %40 = vector.load %arg5[%c0_30, %c0_31] : memref<16x128xf32, #tpu.memory_space<vmem>>, vector<16x128xf32>
    tpu.vector_store %arg5[%c0_30, %c0_31], %39 {strides = array<i32>} : memref<16x128xf32, #tpu.memory_space<vmem>>, vector<16x128xf32>,
    return
  }
  func.func @transform_0(%arg0: i32) -> (i32, i32) {
    %c0_i32 = arith.constant 0 : i32
    %c0_i32_0 = arith.constant 0 : i32
    return %arg0, %c0_i32 : i32, i32
  }
  func.func @transform_1(%arg0: i32) -> (i32, i32) {
    %c0_i32 = arith.constant 0 : i32
    %c0_i32_0 = arith.constant 0 : i32
    return %arg0, %c0_i32 : i32, i32
  }
  func.func @transform_2(%arg0: i32) -> (i32, i32) {
    %c0_i32 = arith.constant 0 : i32
    %c0_i32_0 = arith.constant 0 : i32
    %c0_i32_1 = arith.constant 0 : i32
    return %c0_i32, %c0_i32_0 : i32, i32
  }
  func.func @transform_3(%arg0: i32) -> (i32, i32) {
    %c0_i32 = arith.constant 0 : i32
    %c0_i32_0 = arith.constant 0 : i32
    %c0_i32_1 = arith.constant 0 : i32
    return %c0_i32, %c0_i32_0 : i32, i32
  }
  func.func @transform_4(%arg0: i32) -> (i32, i32) {
    %c0_i32 = arith.constant 0 : i32
    %c0_i32_0 = arith.constant 0 : i32
    return %arg0, %c0_i32 : i32, i32
  }
  func.func @transform_5(%arg0: i32) -> (i32, i32) {
    %c0_i32 = arith.constant 0 : i32
    %c0_i32_0 = arith.constant 0 : i32
    return %arg0, %c0_i32 : i32, i32
  }
  func.func @transform_6(%arg0: i32) -> (i32, i32) {
    %c0_i32 = arith.constant 0 : i32
    %c0_i32_0 = arith.constant 0 : i32
    return %arg0, %c0_i32 : i32, i32
  }
}

</mosaic_0001>

<llo_original>
// kernel: tpu_custom_call.1
$region0: #{tpu_custom_call.1}
  #allocation0 [shape = 'u32[]', space=smem, size = 0x4, offset = 0x4, fixed_abs, tag = 'smem constant byte address 0x4 - core index']
  #allocation1 [shape = 'u32[144,128]{1,0:T(1,128)}', space=vmem, size = 0x12000, scoped, tag = 'internal scratch']
  %s0 = inlined_call_operand.vmem [shape: f32[16,128], index: 0, kind: input, shape index: {}]
  %s1 = inlined_call_operand.vmem [shape: f32[8,128], index: 1, kind: input, shape index: {}]
  %s2 = inlined_call_operand.vmem [shape: f32[64,16], index: 2, kind: input, shape index: {}]
  %s3 = inlined_call_operand.hbm [shape: f32[512,128], index: 3, kind: input, shape index: {}]
  %s4 = inlined_call_operand.hbm [shape: f32[16,128], index: 4, kind: output, shape index: {0}]
  %s5 = inlined_call_operand.hbm [shape: f32[16,128], index: 5, kind: output, shape index: {1}]
  %s6 = inlined_call_operand.hbm [shape: f32[16,128], index: 6, kind: output, shape index: {2}]
  %7 = xla_tuple %s4, %s5, %s6
  %s8 = sld [smem:[#allocation0]]
  $region46: #{tpu_custom_call.1} parent=0
    _
  %s10 = ssub.s32 1, %s8
  %s11 = scalar_select 0, %s10, %s8
  $region1: #{tpu_custom_call.1} parent=0
    #allocation2 [shape = 'u8[262144]{0}', space=vmem, size = 0x40000, scoped, tag = 'input window, operand 3, single buffered']
    #allocation3 [shape = 's32[1]{0}', space=sflag, size = 0x4, scoped, tag = 'scoped memory for tpu_custom_call.1']
    #allocation4 [shape = 's32[1]{0}', space=sflag, size = 0x4, scoped, tag = 'scoped memory for tpu_custom_call.1']
    #allocation5 [shape = 'u8[8192]{0}', space=vmem, size = 0x2000, scoped, tag = 'output window, operand 0, single buffered']
    #allocation6 [shape = 'u8[8192]{0}', space=vmem, size = 0x2000, scoped, tag = 'output window, operand 1, single buffered']
    #allocation7 [shape = 's32[1]{0}', space=sflag, size = 0x4, scoped, tag = 'scoped memory for tpu_custom_call.1']
    #allocation8 [shape = 'u8[8192]{0}', space=vmem, size = 0x2000, scoped, tag = 'output window, operand 2, single buffered']
    %12 = vsyncpa [#allocation3], 0
    %13 = vsyncpa [#allocation4], 0
    %14 = vsyncpa [#allocation7], 0
    // Predicated region
    $region2: #{tpu_custom_call.1} parent=1 // pred_check
      _
    $region3: #{tpu_custom_call.1} parent=1 // pred_check_branch
      %16 = sbr.rel (0) target = $region5
    $region4: #{tpu_custom_call.1} parent=1 // pred_region
      _
    $region5: #{tpu_custom_call.1} parent=1 // pred_fallthru
      _
    // Predicated region
    $region6: #{tpu_custom_call.1} parent=1 // pred_check
      _
    $region7: #{tpu_custom_call.1} parent=1 // pred_check_branch
      %18 = sbr.rel (0) target = $region9
    $region8: #{tpu_custom_call.1} parent=1 // pred_region
      _
    $region9: #{tpu_custom_call.1} parent=1 // pred_fallthru
      _
    // Predicated region
    $region10: #{tpu_custom_call.1} parent=1 // pred_check
      _
    $region11: #{tpu_custom_call.1} parent=1 // pred_check_branch
      %20 = sbr.rel (0) target = $region13
    $region12: #{tpu_custom_call.1} parent=1 // pred_region
      _
    $region13: #{tpu_custom_call.1} parent=1 // pred_fallthru
      _
    // Predicated region
    $region14: #{tpu_custom_call.1} parent=1 // pred_check
      _
    $region15: #{tpu_custom_call.1} parent=1 // pred_check_branch
      %22 = sbr.rel (0) target = $region17
    $region16: #{tpu_custom_call.1} parent=1 // pred_region
      %s24 = ssub.s32 8192, 8192
      %25 = vsyncadd [#allocation3], %s24
      %s26 = sshll.u32 [#allocation2], 4
      %s27 = int_to_ptr.vmem [resolvable:$true] %s26
      %32 = dma.hbm_to_vmem [thread:$0]  %s3, 8192, %s27, [#allocation3], 128, 128, 8
    $region17: #{tpu_custom_call.1} parent=1 // pred_fallthru
      _
    // Predicated region
    $region18: #{tpu_custom_call.1} parent=1 // pred_check
      _
    $region19: #{tpu_custom_call.1} parent=1 // pred_check_branch
      %34 = sbr.rel (0) target = $region21
    $region20: #{tpu_custom_call.1} parent=1 // pred_region
      %35 = dma.done [#allocation3], 8192
    $region21: #{tpu_custom_call.1} parent=1 // pred_fallthru
      _
    %v36 = vld [vmem:[%s0] sm:$0xff]
    %v37 = vld [vmem:[%s0 + $0x8] sm:$0xff]
    %v38 = vld [vmem:[%s2] sm:$0xff]
    %v39 = vld [vmem:[%s2 + $0x8] sm:$0xff]
    %v40 = vld [vmem:[%s2 + $0x10] sm:$0xff]
    %v41 = vld [vmem:[%s2 + $0x18] sm:$0xff]
    %v42 = vld [vmem:[%s2 + $0x20] sm:$0xff]
    %v43 = vld [vmem:[%s2 + $0x28] sm:$0xff]
    %v44 = vld [vmem:[%s2 + $0x30] sm:$0xff]
    %v45 = vld [vmem:[%s2 + $0x38] sm:$0xff]
    %v46 = vld [vmem:[#allocation2] sm:$0xff]
    %v47 = vld [vmem:[#allocation2 + $0x8] sm:$0xff]
    %v48 = vld [vmem:[#allocation2 + $0x10] sm:$0xff]
    %v49 = vld [vmem:[#allocation2 + $0x18] sm:$0xff]
    %v50 = vld [vmem:[#allocation2 + $0x20] sm:$0xff]
    %v51 = vld [vmem:[#allocation2 + $0x28] sm:$0xff]
    %v52 = vld [vmem:[#allocation2 + $0x30] sm:$0xff]
    %v53 = vld [vmem:[#allocation2 + $0x38] sm:$0xff]
    %v54 = vld [vmem:[#allocation2 + $0x40] sm:$0xff]
    %v55 = vld [vmem:[#allocation2 + $0x48] sm:$0xff]
    %v56 = vld [vmem:[#allocation2 + $0x50] sm:$0xff]
    %v57 = vld [vmem:[#allocation2 + $0x58] sm:$0xff]
    %v58 = vld [vmem:[#allocation2 + $0x60] sm:$0xff]
    %v59 = vld [vmem:[#allocation2 + $0x68] sm:$0xff]
    %v60 = vld [vmem:[#allocation2 + $0x70] sm:$0xff]
    %v61 = vld [vmem:[#allocation2 + $0x78] sm:$0xff]
    %v62 = vld [vmem:[#allocation2 + $0x80] sm:$0xff]
    %v63 = vld [vmem:[#allocation2 + $0x88] sm:$0xff]
    %v64 = vld [vmem:[#allocation2 + $0x90] sm:$0xff]
    %v65 = vld [vmem:[#allocation2 + $0x98] sm:$0xff]
    %v66 = vld [vmem:[#allocation2 + $0xa0] sm:$0xff]
    %v67 = vld [vmem:[#allocation2 + $0xa8] sm:$0xff]
    %v68 = vld [vmem:[#allocation2 + $0xb0] sm:$0xff]
    %v69 = vld [vmem:[#allocation2 + $0xb8] sm:$0xff]
    %v70 = vld [vmem:[#allocation2 + $0xc0] sm:$0xff]
    %v71 = vld [vmem:[#allocation2 + $0xc8] sm:$0xff]
    %v72 = vld [vmem:[#allocation2 + $0xd0] sm:$0xff]
    %v73 = vld [vmem:[#allocation2 + $0xd8] sm:$0xff]
    %v74 = vld [vmem:[#allocation2 + $0xe0] sm:$0xff]
    %v75 = vld [vmem:[#allocation2 + $0xe8] sm:$0xff]
    %v76 = vld [vmem:[#allocation2 + $0xf0] sm:$0xff]
    %v77 = vld [vmem:[#allocation2 + $0xf8] sm:$0xff]
    %v78 = vld [vmem:[#allocation2 + $0x100] sm:$0xff]
    %v79 = vld [vmem:[#allocation2 + $0x108] sm:$0xff]
    %v80 = vld [vmem:[#allocation2 + $0x110] sm:$0xff]
    %v81 = vld [vmem:[#allocation2 + $0x118] sm:$0xff]
    %v82 = vld [vmem:[#allocation2 + $0x120] sm:$0xff]
    %v83 = vld [vmem:[#allocation2 + $0x128] sm:$0xff]
    %v84 = vld [vmem:[#allocation2 + $0x130] sm:$0xff]
    %v85 = vld [vmem:[#allocation2 + $0x138] sm:$0xff]
    %v86 = vld [vmem:[#allocation2 + $0x140] sm:$0xff]
    %v87 = vld [vmem:[#allocation2 + $0x148] sm:$0xff]
    %v88 = vld [vmem:[#allocation2 + $0x150] sm:$0xff]
    %v89 = vld [vmem:[#allocation2 + $0x158] sm:$0xff]
    %v90 = vld [vmem:[#allocation2 + $0x160] sm:$0xff]
    %v91 = vld [vmem:[#allocation2 + $0x168] sm:$0xff]
    %v92 = vld [vmem:[#allocation2 + $0x170] sm:$0xff]
    %v93 = vld [vmem:[#allocation2 + $0x178] sm:$0xff]
    %v94 = vld [vmem:[#allocation2 + $0x180] sm:$0xff]
    %v95 = vld [vmem:[#allocation2 + $0x188] sm:$0xff]
    %v96 = vld [vmem:[#allocation2 + $0x190] sm:$0xff]
    %v97 = vld [vmem:[#allocation2 + $0x198] sm:$0xff]
    %v98 = vld [vmem:[#allocation2 + $0x1a0] sm:$0xff]
    %v99 = vld [vmem:[#allocation2 + $0x1a8] sm:$0xff]
    %v100 = vld [vmem:[#allocation2 + $0x1b0] sm:$0xff]
    %v101 = vld [vmem:[#allocation2 + $0x1b8] sm:$0xff]
    %v102 = vld [vmem:[#allocation2 + $0x1c0] sm:$0xff]
    %v103 = vld [vmem:[#allocation2 + $0x1c8] sm:$0xff]
    %v104 = vld [vmem:[#allocation2 + $0x1d0] sm:$0xff]
    %v105 = vld [vmem:[#allocation2 + $0x1d8] sm:$0xff]
    %v106 = vld [vmem:[#allocation2 + $0x1e0] sm:$0xff]
    %v107 = vld [vmem:[#allocation2 + $0x1e8] sm:$0xff]
    %v108 = vld [vmem:[#allocation2 + $0x1f0] sm:$0xff]
    %v109 = vld [vmem:[#allocation2 + $0x1f8] sm:$0xff]
    %vm110 = vcmask 130048
    %v112 = vsel %vm110, %v38, 0
    %v115 = vsel %vm110, %v39, 0
    %117 = vmatprep.subr.mxu0 0.0
    %118 = vmatpush1.msra.mxu0 0.0
    %119 = vmatprep.subr.mxu0 0.0
    %120 = vmatpush1.msra.mxu0 0.0
    %121 = vmatprep.subr.mxu0 0.0
    %122 = vmatpush1.msra.mxu0 0.0
    %123 = vmatprep.subr.mxu0 0.0
    %124 = vmatpush1.msra.mxu0 0.0
    %125 = vmatprep.subr.mxu0 0.0
    %126 = vmatpush1.msra.mxu0 0.0
    %127 = vmatprep.subr.mxu0 0.0
    %128 = vmatpush1.msra.mxu0 0.0
    %129 = vmatprep.subr.mxu0 0.0
    %130 = vmatpush1.msra.mxu0 0.0
    %131 = vmatprep.subr.mxu0 0.0
    %132 = vmatpush1.msra.mxu0 0.0
    %133 = vmatprep.subr.mxu0 0.0
    %134 = vmatpush1.msra.mxu0 0.0
    %135 = vmatprep.subr.mxu0 0.0
    %136 = vmatpush1.msra.mxu0 0.0
    %137 = vmatprep.subr.mxu0 0.0
    %138 = vmatpush1.msra.mxu0 0.0
    %139 = vmatprep.subr.mxu0 0.0
    %140 = vmatpush1.msra.mxu0 0.0
    %141 = vmatprep.subr.mxu0 0.0
    %142 = vmatpush1.msra.mxu0 0.0
    %143 = vmatprep.subr.mxu0 0.0
    %144 = vmatpush1.msra.mxu0 0.0
    %145 = vmatprep.subr.mxu0 0.0
    %146 = vmatpush1.msra.mxu0 %v37
    %147 = vmatprep.subr.mxu0 0.0
    %148 = vmatpush1.msra.mxu0 %v36
    %149 = vmatprep.subr.mxu0 0.0
    %150 = vmatpush2.msra.mxu0 0.0
    %151 = vmatprep.subr.mxu0 0.0
    %152 = vmatpush2.msra.mxu0 0.0
    %153 = vmatprep.subr.mxu0 0.0
    %154 = vmatpush2.msra.mxu0 0.0
    %155 = vmatprep.subr.mxu0 0.0
    %156 = vmatpush2.msra.mxu0 0.0
    %157 = vmatprep.subr.mxu0 0.0
    %158 = vmatpush2.msra.mxu0 0.0
    %159 = vmatprep.subr.mxu0 0.0
    %160 = vmatpush2.msra.mxu0 0.0
    %161 = vmatprep.subr.mxu0 0.0
    %162 = vmatpush2.msra.mxu0 0.0
    %163 = vmatprep.subr.mxu0 0.0
    %164 = vmatpush2.msra.mxu0 0.0
    %165 = vmatprep.subr.mxu0 0.0
    %166 = vmatpush2.msra.mxu0 0.0
    %167 = vmatprep.subr.mxu0 0.0
    %168 = vmatpush2.msra.mxu0 0.0
    %169 = vmatprep.subr.mxu0 0.0
    %170 = vmatpush2.msra.mxu0 0.0
    %171 = vmatprep.subr.mxu0 0.0
    %172 = vmatpush2.msra.mxu0 0.0
    %173 = vmatprep.subr.mxu0 0.0
    %174 = vmatpush2.msra.mxu0 0.0
    %175 = vmatprep.subr.mxu0 0.0
    %176 = vmatpush2.msra.mxu0 0.0
    %177 = vmatprep.subr.mxu0 0.0
    %178 = vmatpush2.msra.mxu0 0.0
    %179 = vmatprep.subr.mxu0 0.0
    %180 = vmatpush2.msra.mxu0 0.0
    %181 = vmatprep.mubr.f32.mxu0 0.0
    %182 = vmatmul.mubr.f32.gmra.mxu0 %v112
    %v183 = vpop.f32.mrf.mxu0
    %v184 = vadd.f32 0.0, %v183
    %v185 = vpop.f32.mrf.mxu0
    %186 = vmatprep.mubr.f32.mxu0 0.0
    %187 = vmatmul.mubr.f32.gmra.mxu0 %v115
    %v188 = vpop.f32.mrf.mxu0
    %v189 = vadd.f32 0.0, %v188
    %v190 = vpop.f32.mrf.mxu0
    %191 = vdwg.mxu0
    %v193 = vsel %vm110, %v40, 0
    %v196 = vsel %vm110, %v41, 0
    %198 = vmatprep.subr.mxu0 0.0
    %199 = vmatpush1.msra.mxu0 0.0
    %200 = vmatprep.subr.mxu0 0.0
    %201 = vmatpush1.msra.mxu0 0.0
    %202 = vmatprep.subr.mxu0 0.0
    %203 = vmatpush1.msra.mxu0 0.0
    %204 = vmatprep.subr.mxu0 0.0
    %205 = vmatpush1.msra.mxu0 0.0
    %206 = vmatprep.subr.mxu0 0.0
    %207 = vmatpush1.msra.mxu0 0.0
    %208 = vmatprep.subr.mxu0 0.0
    %209 = vmatpush1.msra.mxu0 0.0
    %210 = vmatprep.subr.mxu0 0.0
    %211 = vmatpush1.msra.mxu0 0.0
    %212 = vmatprep.subr.mxu0 0.0
    %213 = vmatpush1.msra.mxu0 0.0
    %214 = vmatprep.subr.mxu0 0.0
    %215 = vmatpush1.msra.mxu0 0.0
    %216 = vmatprep.subr.mxu0 0.0
    %217 = vmatpush1.msra.mxu0 0.0
    %218 = vmatprep.subr.mxu0 0.0
    %219 = vmatpush1.msra.mxu0 0.0
    %220 = vmatprep.subr.mxu0 0.0
    %221 = vmatpush1.msra.mxu0 0.0
    %222 = vmatprep.subr.mxu0 0.0
    %223 = vmatpush1.msra.mxu0 0.0
    %224 = vmatprep.subr.mxu0 0.0
    %225 = vmatpush1.msra.mxu0 0.0
    %226 = vmatprep.subr.mxu0 0.0
    %227 = vmatpush1.msra.mxu0 %v37
    %228 = vmatprep.subr.mxu0 0.0
    %229 = vmatpush1.msra.mxu0 %v36
    %230 = vmatprep.subr.mxu0 0.0
    %231 = vmatpush2.msra.mxu0 0.0
    %232 = vmatprep.subr.mxu0 0.0
    %233 = vmatpush2.msra.mxu0 0.0
    %234 = vmatprep.subr.mxu0 0.0
    %235 = vmatpush2.msra.mxu0 0.0
    %236 = vmatprep.subr.mxu0 0.0
    %237 = vmatpush2.msra.mxu0 0.0
    %238 = vmatprep.subr.mxu0 0.0
    %239 = vmatpush2.msra.mxu0 0.0
    %240 = vmatprep.subr.mxu0 0.0
    %241 = vmatpush2.msra.mxu0 0.0
    %242 = vmatprep.subr.mxu0 0.0
    %243 = vmatpush2.msra.mxu0 0.0
    %244 = vmatprep.subr.mxu0 0.0
    %245 = vmatpush2.msra.mxu0 0.0
    %246 = vmatprep.subr.mxu0 0.0
    %247 = vmatpush2.msra.mxu0 0.0
    %248 = vmatprep.subr.mxu0 0.0
    %249 = vmatpush2.msra.mxu0 0.0
    %250 = vmatprep.subr.mxu0 0.0
    %251 = vmatpush2.msra.mxu0 0.0
    %252 = vmatprep.subr.mxu0 0.0
    %253 = vmatpush2.msra.mxu0 0.0
    %254 = vmatprep.subr.mxu0 0.0
    %255 = vmatpush2.msra.mxu0 0.0
    %256 = vmatprep.subr.mxu0 0.0
    %257 = vmatpush2.msra.mxu0 0.0
    %258 = vmatprep.subr.mxu0 0.0
    %259 = vmatpush2.msra.mxu0 0.0
    %260 = vmatprep.subr.mxu0 0.0
    %261 = vmatpush2.msra.mxu0 0.0
    %262 = vmatprep.mubr.f32.mxu0 0.0
    %263 = vmatmul.mubr.f32.gmra.mxu0 %v193
    %v264 = vpop.f32.mrf.mxu0
    %v265 = vadd.f32 0.0, %v264
    %v266 = vpop.f32.mrf.mxu0
    %267 = vmatprep.mubr.f32.mxu0 0.0
    %268 = vmatmul.mubr.f32.gmra.mxu0 %v196
    %v269 = vpop.f32.mrf.mxu0
    %v270 = vadd.f32 0.0, %v269
    %v271 = vpop.f32.mrf.mxu0
    %272 = vdwg.mxu0
    %273 = vmatprep.subr.mxu0 0.0
    %274 = vmatpush1.msra.mxu0 %v61
    %275 = vmatprep.subr.mxu0 0.0
    %276 = vmatpush1.msra.mxu0 %v60
    %277 = vmatprep.subr.mxu0 0.0
    %278 = vmatpush1.msra.mxu0 %v59
    %279 = vmatprep.subr.mxu0 0.0
    %280 = vmatpush1.msra.mxu0 %v58
    %281 = vmatprep.subr.mxu0 0.0
    %282 = vmatpush1.msra.mxu0 %v57
    %283 = vmatprep.subr.mxu0 0.0
    %284 = vmatpush1.msra.mxu0 %v56
    %285 = vmatprep.subr.mxu0 0.0
    %286 = vmatpush1.msra.mxu0 %v55
    %287 = vmatprep.subr.mxu0 0.0
    %288 = vmatpush1.msra.mxu0 %v54
    %289 = vmatprep.subr.mxu0 0.0
    %290 = vmatpush1.msra.mxu0 %v53
    %291 = vmatprep.subr.mxu0 0.0
    %292 = vmatpush1.msra.mxu0 %v52
    %293 = vmatprep.subr.mxu0 0.0
    %294 = vmatpush1.msra.mxu0 %v51
    %295 = vmatprep.subr.mxu0 0.0
    %296 = vmatpush1.msra.mxu0 %v50
    %297 = vmatprep.subr.mxu0 0.0
    %298 = vmatpush1.msra.mxu0 %v49
    %299 = vmatprep.subr.mxu0 0.0
    %300 = vmatpush1.msra.mxu0 %v48
    %301 = vmatprep.subr.mxu0 0.0
    %302 = vmatpush1.msra.mxu0 %v47
    %303 = vmatprep.subr.mxu0 0.0
    %304 = vmatpush1.msra.mxu0 %v46
    %305 = vmatprep.subr.mxu0 0.0
    %306 = vmatpush2.msra.mxu0 0.0
    %307 = vmatprep.subr.mxu0 0.0
    %308 = vmatpush2.msra.mxu0 0.0
    %309 = vmatprep.subr.mxu0 0.0
    %310 = vmatpush2.msra.mxu0 0.0
    %311 = vmatprep.subr.mxu0 0.0
    %312 = vmatpush2.msra.mxu0 0.0
    %313 = vmatprep.subr.mxu0 0.0
    %314 = vmatpush2.msra.mxu0 0.0
    %315 = vmatprep.subr.mxu0 0.0
    %316 = vmatpush2.msra.mxu0 0.0
    %317 = vmatprep.subr.mxu0 0.0
    %318 = vmatpush2.msra.mxu0 0.0
    %319 = vmatprep.subr.mxu0 0.0
    %320 = vmatpush2.msra.mxu0 0.0
    %321 = vmatprep.subr.mxu0 0.0
    %322 = vmatpush2.msra.mxu0 0.0
    %323 = vmatprep.subr.mxu0 0.0
    %324 = vmatpush2.msra.mxu0 0.0
    %325 = vmatprep.subr.mxu0 0.0
    %326 = vmatpush2.msra.mxu0 0.0
    %327 = vmatprep.subr.mxu0 0.0
    %328 = vmatpush2.msra.mxu0 0.0
    %329 = vmatprep.subr.mxu0 0.0
    %330 = vmatpush2.msra.mxu0 0.0
    %331 = vmatprep.subr.mxu0 0.0
    %332 = vmatpush2.msra.mxu0 0.0
    %333 = vmatprep.subr.mxu0 0.0
    %334 = vmatpush2.msra.mxu0 0.0
    %335 = vmatprep.subr.mxu0 0.0
    %336 = vmatpush2.msra.mxu0 0.0
    %337 = vmatprep.mubr.f32.mxu0 0.0
    %338 = vmatmul.mubr.f32.gmra.mxu0 %v184
    %v339 = vpop.f32.mrf.mxu0
    %v340 = vadd.f32 0.0, %v339
    %v341 = vpop.f32.mrf.mxu0
    %342 = vmatprep.mubr.f32.mxu0 0.0
    %343 = vmatmul.mubr.f32.gmra.mxu0 %v189
    %v344 = vpop.f32.mrf.mxu0
    %v345 = vadd.f32 0.0, %v344
    %v346 = vpop.f32.mrf.mxu0
    %347 = vdwg.mxu0
    %348 = vmatprep.subr.mxu0 0.0
    %349 = vmatpush1.msra.mxu0 %v77
    %350 = vmatprep.subr.mxu0 0.0
    %351 = vmatpush1.msra.mxu0 %v76
    %352 = vmatprep.subr.mxu0 0.0
    %353 = vmatpush1.msra.mxu0 %v75
    %354 = vmatprep.subr.mxu0 0.0
    %355 = vmatpush1.msra.mxu0 %v74
    %356 = vmatprep.subr.mxu0 0.0
    %357 = vmatpush1.msra.mxu0 %v73
    %358 = vmatprep.subr.mxu0 0.0
    %359 = vmatpush1.msra.mxu0 %v72
    %360 = vmatprep.subr.mxu0 0.0
    %361 = vmatpush1.msra.mxu0 %v71
    %362 = vmatprep.subr.mxu0 0.0
    %363 = vmatpush1.msra.mxu0 %v70
    %364 = vmatprep.subr.mxu0 0.0
    %365 = vmatpush1.msra.mxu0 %v69
    %366 = vmatprep.subr.mxu0 0.0
    %367 = vmatpush1.msra.mxu0 %v68
    %368 = vmatprep.subr.mxu0 0.0
    %369 = vmatpush1.msra.mxu0 %v67
    %370 = vmatprep.subr.mxu0 0.0
    %371 = vmatpush1.msra.mxu0 %v66
    %372 = vmatprep.subr.mxu0 0.0
    %373 = vmatpush1.msra.mxu0 %v65
    %374 = vmatprep.subr.mxu0 0.0
    %375 = vmatpush1.msra.mxu0 %v64
    %376 = vmatprep.subr.mxu0 0.0
    %377 = vmatpush1.msra.mxu0 %v63
    %378 = vmatprep.subr.mxu0 0.0
    %379 = vmatpush1.msra.mxu0 %v62
    %380 = vmatprep.subr.mxu0 0.0
    %381 = vmatpush2.msra.mxu0 0.0
    %382 = vmatprep.subr.mxu0 0.0
    %383 = vmatpush2.msra.mxu0 0.0
    %384 = vmatprep.subr.mxu0 0.0
    %385 = vmatpush2.msra.mxu0 0.0
    %386 = vmatprep.subr.mxu0 0.0
    %387 = vmatpush2.msra.mxu0 0.0
    %388 = vmatprep.subr.mxu0 0.0
    %389 = vmatpush2.msra.mxu0 0.0
    %390 = vmatprep.subr.mxu0 0.0
    %391 = vmatpush2.msra.mxu0 0.0
    %392 = vmatprep.subr.mxu0 0.0
    %393 = vmatpush2.msra.mxu0 0.0
    %394 = vmatprep.subr.mxu0 0.0
    %395 = vmatpush2.msra.mxu0 0.0
    %396 = vmatprep.subr.mxu0 0.0
    %397 = vmatpush2.msra.mxu0 0.0
    %398 = vmatprep.subr.mxu0 0.0
    %399 = vmatpush2.msra.mxu0 0.0
    %400 = vmatprep.subr.mxu0 0.0
    %401 = vmatpush2.msra.mxu0 0.0
    %402 = vmatprep.subr.mxu0 0.0
    %403 = vmatpush2.msra.mxu0 0.0
    %404 = vmatprep.subr.mxu0 0.0
    %405 = vmatpush2.msra.mxu0 0.0
    %406 = vmatprep.subr.mxu0 0.0
    %407 = vmatpush2.msra.mxu0 0.0
    %408 = vmatprep.subr.mxu0 0.0
    %409 = vmatpush2.msra.mxu0 0.0
    %410 = vmatprep.subr.mxu0 0.0
    %411 = vmatpush2.msra.mxu0 0.0
    %412 = vmatprep.mubr.f32.mxu0 0.0
    %413 = vmatmul.mubr.f32.gmra.mxu0 %v265
    %v414 = vpop.f32.mrf.mxu0
    %v415 = vadd.f32 0.0, %v414
    %v416 = vpop.f32.mrf.mxu0
    %417 = vmatprep.mubr.f32.mxu0 0.0
    %418 = vmatmul.mubr.f32.gmra.mxu0 %v270
    %v419 = vpop.f32.mrf.mxu0
    %v420 = vadd.f32 0.0, %v419
    %v421 = vpop.f32.mrf.mxu0
    %422 = vdwg.mxu0
    %v423 = vsub.f32 %v340, %v415
    %v424 = vsub.f32 %v345, %v420
    %425 = vmatprep.subr.mxu0 0.0
    %426 = vmatpush1.msra.mxu0 %v61
    %427 = vmatprep.subr.mxu0 0.0
    %428 = vmatpush1.msra.mxu0 %v60
    %429 = vmatprep.subr.mxu0 0.0
    %430 = vmatpush1.msra.mxu0 %v59
    %431 = vmatprep.subr.mxu0 0.0
    %432 = vmatpush1.msra.mxu0 %v58
    %433 = vmatprep.subr.mxu0 0.0
    %434 = vmatpush1.msra.mxu0 %v57
    %435 = vmatprep.subr.mxu0 0.0
    %436 = vmatpush1.msra.mxu0 %v56
    %437 = vmatprep.subr.mxu0 0.0
    %438 = vmatpush1.msra.mxu0 %v55
    %439 = vmatprep.subr.mxu0 0.0
    %440 = vmatpush1.msra.mxu0 %v54
    %441 = vmatprep.subr.mxu0 0.0
    %442 = vmatpush1.msra.mxu0 %v53
    %443 = vmatprep.subr.mxu0 0.0
    %444 = vmatpush1.msra.mxu0 %v52
    %445 = vmatprep.subr.mxu0 0.0
    %446 = vmatpush1.msra.mxu0 %v51
    %447 = vmatprep.subr.mxu0 0.0
    %448 = vmatpush1.msra.mxu0 %v50
    %449 = vmatprep.subr.mxu0 0.0
    %450 = vmatpush1.msra.mxu0 %v49
    %451 = vmatprep.subr.mxu0 0.0
    %452 = vmatpush1.msra.mxu0 %v48
    %453 = vmatprep.subr.mxu0 0.0
    %454 = vmatpush1.msra.mxu0 %v47
    %455 = vmatprep.subr.mxu0 0.0
    %456 = vmatpush1.msra.mxu0 %v46
    %457 = vmatprep.subr.mxu0 0.0
    %458 = vmatpush2.msra.mxu0 0.0
    %459 = vmatprep.subr.mxu0 0.0
    %460 = vmatpush2.msra.mxu0 0.0
    %461 = vmatprep.subr.mxu0 0.0
    %462 = vmatpush2.msra.mxu0 0.0
    %463 = vmatprep.subr.mxu0 0.0
    %464 = vmatpush2.msra.mxu0 0.0
    %465 = vmatprep.subr.mxu0 0.0
    %466 = vmatpush2.msra.mxu0 0.0
    %467 = vmatprep.subr.mxu0 0.0
    %468 = vmatpush2.msra.mxu0 0.0
    %469 = vmatprep.subr.mxu0 0.0
    %470 = vmatpush2.msra.mxu0 0.0
    %471 = vmatprep.subr.mxu0 0.0
    %472 = vmatpush2.msra.mxu0 0.0
    %473 = vmatprep.subr.mxu0 0.0
    %474 = vmatpush2.msra.mxu0 0.0
    %475 = vmatprep.subr.mxu0 0.0
    %476 = vmatpush2.msra.mxu0 0.0
    %477 = vmatprep.subr.mxu0 0.0
    %478 = vmatpush2.msra.mxu0 0.0
    %479 = vmatprep.subr.mxu0 0.0
    %480 = vmatpush2.msra.mxu0 0.0
    %481 = vmatprep.subr.mxu0 0.0
    %482 = vmatpush2.msra.mxu0 0.0
    %483 = vmatprep.subr.mxu0 0.0
    %484 = vmatpush2.msra.mxu0 0.0
    %485 = vmatprep.subr.mxu0 0.0
    %486 = vmatpush2.msra.mxu0 0.0
    %487 = vmatprep.subr.mxu0 0.0
    %488 = vmatpush2.msra.mxu0 0.0
    %489 = vmatprep.mubr.f32.mxu0 0.0
    %490 = vmatmul.mubr.f32.gmra.mxu0 %v265
    %v491 = vpop.f32.mrf.mxu0
    %v492 = vadd.f32 0.0, %v491
    %v493 = vpop.f32.mrf.mxu0
    %494 = vmatprep.mubr.f32.mxu0 0.0
    %495 = vmatmul.mubr.f32.gmra.mxu0 %v270
    %v496 = vpop.f32.mrf.mxu0
    %v497 = vadd.f32 0.0, %v496
    %v498 = vpop.f32.mrf.mxu0
    %499 = vdwg.mxu0
    %500 = vmatprep.subr.mxu0 0.0
    %501 = vmatpush1.msra.mxu0 %v77
    %502 = vmatprep.subr.mxu0 0.0
    %503 = vmatpush1.msra.mxu0 %v76
    %504 = vmatprep.subr.mxu0 0.0
    %505 = vmatpush1.msra.mxu0 %v75
    %506 = vmatprep.subr.mxu0 0.0
    %507 = vmatpush1.msra.mxu0 %v74
    %508 = vmatprep.subr.mxu0 0.0
    %509 = vmatpush1.msra.mxu0 %v73
    %510 = vmatprep.subr.mxu0 0.0
    %511 = vmatpush1.msra.mxu0 %v72
    %512 = vmatprep.subr.mxu0 0.0
    %513 = vmatpush1.msra.mxu0 %v71
    %514 = vmatprep.subr.mxu0 0.0
    %515 = vmatpush1.msra.mxu0 %v70
    %516 = vmatprep.subr.mxu0 0.0
    %517 = vmatpush1.msra.mxu0 %v69
    %518 = vmatprep.subr.mxu0 0.0
    %519 = vmatpush1.msra.mxu0 %v68
    %520 = vmatprep.subr.mxu0 0.0
    %521 = vmatpush1.msra.mxu0 %v67
    %522 = vmatprep.subr.mxu0 0.0
    %523 = vmatpush1.msra.mxu0 %v66
    %524 = vmatprep.subr.mxu0 0.0
    %525 = vmatpush1.msra.mxu0 %v65
    %526 = vmatprep.subr.mxu0 0.0
    %527 = vmatpush1.msra.mxu0 %v64
    %528 = vmatprep.subr.mxu0 0.0
    %529 = vmatpush1.msra.mxu0 %v63
    %530 = vmatprep.subr.mxu0 0.0
    %531 = vmatpush1.msra.mxu0 %v62
    %532 = vmatprep.subr.mxu0 0.0
    %533 = vmatpush2.msra.mxu0 0.0
    %534 = vmatprep.subr.mxu0 0.0
    %535 = vmatpush2.msra.mxu0 0.0
    %536 = vmatprep.subr.mxu0 0.0
    %537 = vmatpush2.msra.mxu0 0.0
    %538 = vmatprep.subr.mxu0 0.0
    %539 = vmatpush2.msra.mxu0 0.0
    %540 = vmatprep.subr.mxu0 0.0
    %541 = vmatpush2.msra.mxu0 0.0
    %542 = vmatprep.subr.mxu0 0.0
    %543 = vmatpush2.msra.mxu0 0.0
    %544 = vmatprep.subr.mxu0 0.0
    %545 = vmatpush2.msra.mxu0 0.0
    %546 = vmatprep.subr.mxu0 0.0
    %547 = vmatpush2.msra.mxu0 0.0
    %548 = vmatprep.subr.mxu0 0.0
    %549 = vmatpush2.msra.mxu0 0.0
    %550 = vmatprep.subr.mxu0 0.0
    %551 = vmatpush2.msra.mxu0 0.0
    %552 = vmatprep.subr.mxu0 0.0
    %553 = vmatpush2.msra.mxu0 0.0
    %554 = vmatprep.subr.mxu0 0.0
    %555 = vmatpush2.msra.mxu0 0.0
    %556 = vmatprep.subr.mxu0 0.0
    %557 = vmatpush2.msra.mxu0 0.0
    %558 = vmatprep.subr.mxu0 0.0
    %559 = vmatpush2.msra.mxu0 0.0
    %560 = vmatprep.subr.mxu0 0.0
    %561 = vmatpush2.msra.mxu0 0.0
    %562 = vmatprep.subr.mxu0 0.0
    %563 = vmatpush2.msra.mxu0 0.0
    %564 = vmatprep.mubr.f32.mxu0 0.0
    %565 = vmatmul.mubr.f32.gmra.mxu0 %v184
    %v566 = vpop.f32.mrf.mxu0
    %v567 = vadd.f32 %v492, %v566
    %v568 = vpop.f32.mrf.mxu0
    %569 = vmatprep.mubr.f32.mxu0 0.0
    %570 = vmatmul.mubr.f32.gmra.mxu0 %v189
    %v571 = vpop.f32.mrf.mxu0
    %v572 = vadd.f32 %v497, %v571
    %v573 = vpop.f32.mrf.mxu0
    %574 = vdwg.mxu0
    %575 = vst [vmem:[#allocation6] sm:$0xff] %v423
    %576 = vst [vmem:[#allocation6 + $0x8] sm:$0xff] %v424
    %577 = vst [vmem:[#allocation8] sm:$0xff] %v567
    %578 = vst [vmem:[#allocation8 + $0x8] sm:$0xff] %v572
    %v579 = vld [vmem:[%s1] sm:$0x1]
    %v580 = vlaneseq
    %v581 = vshrl.u32 %v580, 7
    %v582 = vsub.s32 0, %v581
    %v583 = vrot.slane %v579, %v582
    %v584 = vmul.f32 %v423, %v583
    %v585 = vmul.f32 %v424, %v583
    %v586 = vmul.f32 %v567, %v583
    %v587 = vmul.f32 %v572, %v583
    %588 = vmatprep.subr.mxu0 0.0
    %589 = vmatpush1.msra.mxu0 %v93
    %590 = vmatprep.subr.mxu0 0.0
    %591 = vmatpush1.msra.mxu0 %v92
    %592 = vmatprep.subr.mxu0 0.0
    %593 = vmatpush1.msra.mxu0 %v91
    %594 = vmatprep.subr.mxu0 0.0
    %595 = vmatpush1.msra.mxu0 %v90
    %596 = vmatprep.subr.mxu0 0.0
    %597 = vmatpush1.msra.mxu0 %v89
    %598 = vmatprep.subr.mxu0 0.0
    %599 = vmatpush1.msra.mxu0 %v88
    %600 = vmatprep.subr.mxu0 0.0
    %601 = vmatpush1.msra.mxu0 %v87
    %602 = vmatprep.subr.mxu0 0.0
    %603 = vmatpush1.msra.mxu0 %v86
    %604 = vmatprep.subr.mxu0 0.0
    %605 = vmatpush1.msra.mxu0 %v85
    %606 = vmatprep.subr.mxu0 0.0
    %607 = vmatpush1.msra.mxu0 %v84
    %608 = vmatprep.subr.mxu0 0.0
    %609 = vmatpush1.msra.mxu0 %v83
    %610 = vmatprep.subr.mxu0 0.0
    %611 = vmatpush1.msra.mxu0 %v82
    %612 = vmatprep.subr.mxu0 0.0
    %613 = vmatpush1.msra.mxu0 %v81
    %614 = vmatprep.subr.mxu0 0.0
    %615 = vmatpush1.msra.mxu0 %v80
    %616 = vmatprep.subr.mxu0 0.0
    %617 = vmatpush1.msra.mxu0 %v79
    %618 = vmatprep.subr.mxu0 0.0
    %619 = vmatpush1.msra.mxu0 %v78
    %620 = vmatprep.subr.mxu0 0.0
    %621 = vmatpush2.msra.mxu0 0.0
    %622 = vmatprep.subr.mxu0 0.0
    %623 = vmatpush2.msra.mxu0 0.0
    %624 = vmatprep.subr.mxu0 0.0
    %625 = vmatpush2.msra.mxu0 0.0
    %626 = vmatprep.subr.mxu0 0.0
    %627 = vmatpush2.msra.mxu0 0.0
    %628 = vmatprep.subr.mxu0 0.0
    %629 = vmatpush2.msra.mxu0 0.0
    %630 = vmatprep.subr.mxu0 0.0
    %631 = vmatpush2.msra.mxu0 0.0
    %632 = vmatprep.subr.mxu0 0.0
    %633 = vmatpush2.msra.mxu0 0.0
    %634 = vmatprep.subr.mxu0 0.0
    %635 = vmatpush2.msra.mxu0 0.0
    %636 = vmatprep.subr.mxu0 0.0
    %637 = vmatpush2.msra.mxu0 0.0
    %638 = vmatprep.subr.mxu0 0.0
    %639 = vmatpush2.msra.mxu0 0.0
    %640 = vmatprep.subr.mxu0 0.0
    %641 = vmatpush2.msra.mxu0 0.0
    %642 = vmatprep.subr.mxu0 0.0
    %643 = vmatpush2.msra.mxu0 0.0
    %644 = vmatprep.subr.mxu0 0.0
    %645 = vmatpush2.msra.mxu0 0.0
    %646 = vmatprep.subr.mxu0 0.0
    %647 = vmatpush2.msra.mxu0 0.0
    %648 = vmatprep.subr.mxu0 0.0
    %649 = vmatpush2.msra.mxu0 0.0
    %650 = vmatprep.subr.mxu0 0.0
    %651 = vmatpush2.msra.mxu0 0.0
    %652 = vmatprep.mubr.f32.mxu0 0.0
    %653 = vmatmul.mubr.f32.gmra.mxu0 %v584
    %v654 = vpop.f32.mrf.mxu0
    %v655 = vadd.f32 0.0, %v654
    %v656 = vpop.f32.mrf.mxu0
    %657 = vmatprep.mubr.f32.mxu0 0.0
    %658 = vmatmul.mubr.f32.gmra.mxu0 %v585
    %v659 = vpop.f32.mrf.mxu0
    %v660 = vadd.f32 0.0, %v659
    %v661 = vpop.f32.mrf.mxu0
    %662 = vdwg.mxu0
    %663 = vmatprep.subr.mxu0 0.0
    %664 = vmatpush1.msra.mxu0 %v109
    %665 = vmatprep.subr.mxu0 0.0
    %666 = vmatpush1.msra.mxu0 %v108
    %667 = vmatprep.subr.mxu0 0.0
    %668 = vmatpush1.msra.mxu0 %v107
    %669 = vmatprep.subr.mxu0 0.0
    %670 = vmatpush1.msra.mxu0 %v106
    %671 = vmatprep.subr.mxu0 0.0
    %672 = vmatpush1.msra.mxu0 %v105
    %673 = vmatprep.subr.mxu0 0.0
    %674 = vmatpush1.msra.mxu0 %v104
    %675 = vmatprep.subr.mxu0 0.0
    %676 = vmatpush1.msra.mxu0 %v103
    %677 = vmatprep.subr.mxu0 0.0
    %678 = vmatpush1.msra.mxu0 %v102
    %679 = vmatprep.subr.mxu0 0.0
    %680 = vmatpush1.msra.mxu0 %v101
    %681 = vmatprep.subr.mxu0 0.0
    %682 = vmatpush1.msra.mxu0 %v100
    %683 = vmatprep.subr.mxu0 0.0
    %684 = vmatpush1.msra.mxu0 %v99
    %685 = vmatprep.subr.mxu0 0.0
    %686 = vmatpush1.msra.mxu0 %v98
    %687 = vmatprep.subr.mxu0 0.0
    %688 = vmatpush1.msra.mxu0 %v97
    %689 = vmatprep.subr.mxu0 0.0
    %690 = vmatpush1.msra.mxu0 %v96
    %691 = vmatprep.subr.mxu0 0.0
    %692 = vmatpush1.msra.mxu0 %v95
    %693 = vmatprep.subr.mxu0 0.0
    %694 = vmatpush1.msra.mxu0 %v94
    %695 = vmatprep.subr.mxu0 0.0
    %696 = vmatpush2.msra.mxu0 0.0
    %697 = vmatprep.subr.mxu0 0.0
    %698 = vmatpush2.msra.mxu0 0.0
    %699 = vmatprep.subr.mxu0 0.0
    %700 = vmatpush2.msra.mxu0 0.0
    %701 = vmatprep.subr.mxu0 0.0
    %702 = vmatpush2.msra.mxu0 0.0
    %703 = vmatprep.subr.mxu0 0.0
    %704 = vmatpush2.msra.mxu0 0.0
    %705 = vmatprep.subr.mxu0 0.0
    %706 = vmatpush2.msra.mxu0 0.0
    %707 = vmatprep.subr.mxu0 0.0
    %708 = vmatpush2.msra.mxu0 0.0
    %709 = vmatprep.subr.mxu0 0.0
    %710 = vmatpush2.msra.mxu0 0.0
    %711 = vmatprep.subr.mxu0 0.0
    %712 = vmatpush2.msra.mxu0 0.0
    %713 = vmatprep.subr.mxu0 0.0
    %714 = vmatpush2.msra.mxu0 0.0
    %715 = vmatprep.subr.mxu0 0.0
    %716 = vmatpush2.msra.mxu0 0.0
    %717 = vmatprep.subr.mxu0 0.0
    %718 = vmatpush2.msra.mxu0 0.0
    %719 = vmatprep.subr.mxu0 0.0
    %720 = vmatpush2.msra.mxu0 0.0
    %721 = vmatprep.subr.mxu0 0.0
    %722 = vmatpush2.msra.mxu0 0.0
    %723 = vmatprep.subr.mxu0 0.0
    %724 = vmatpush2.msra.mxu0 0.0
    %725 = vmatprep.subr.mxu0 0.0
    %726 = vmatpush2.msra.mxu0 0.0
    %727 = vmatprep.mubr.f32.mxu0 0.0
    %728 = vmatmul.mubr.f32.gmra.mxu0 %v586
    %v729 = vpop.f32.mrf.mxu0
    %v730 = vadd.f32 0.0, %v729
    %v731 = vpop.f32.mrf.mxu0
    %732 = vmatprep.mubr.f32.mxu0 0.0
    %733 = vmatmul.mubr.f32.gmra.mxu0 %v587
    %v734 = vpop.f32.mrf.mxu0
    %v735 = vadd.f32 0.0, %v734
    %v736 = vpop.f32.mrf.mxu0
    %737 = vdwg.mxu0
    %v738 = vsub.f32 %v655, %v730
    %v739 = vsub.f32 %v660, %v735
    %740 = vmatprep.subr.mxu0 0.0
    %741 = vmatpush1.msra.mxu0 %v93
    %742 = vmatprep.subr.mxu0 0.0
    %743 = vmatpush1.msra.mxu0 %v92
    %744 = vmatprep.subr.mxu0 0.0
    %745 = vmatpush1.msra.mxu0 %v91
    %746 = vmatprep.subr.mxu0 0.0
    %747 = vmatpush1.msra.mxu0 %v90
    %748 = vmatprep.subr.mxu0 0.0
    %749 = vmatpush1.msra.mxu0 %v89
    %750 = vmatprep.subr.mxu0 0.0
    %751 = vmatpush1.msra.mxu0 %v88
    %752 = vmatprep.subr.mxu0 0.0
    %753 = vmatpush1.msra.mxu0 %v87
    %754 = vmatprep.subr.mxu0 0.0
    %755 = vmatpush1.msra.mxu0 %v86
    %756 = vmatprep.subr.mxu0 0.0
    %757 = vmatpush1.msra.mxu0 %v85
    %758 = vmatprep.subr.mxu0 0.0
    %759 = vmatpush1.msra.mxu0 %v84
    %760 = vmatprep.subr.mxu0 0.0
    %761 = vmatpush1.msra.mxu0 %v83
    %762 = vmatprep.subr.mxu0 0.0
    %763 = vmatpush1.msra.mxu0 %v82
    %764 = vmatprep.subr.mxu0 0.0
    %765 = vmatpush1.msra.mxu0 %v81
    %766 = vmatprep.subr.mxu0 0.0
    %767 = vmatpush1.msra.mxu0 %v80
    %768 = vmatprep.subr.mxu0 0.0
    %769 = vmatpush1.msra.mxu0 %v79
    %770 = vmatprep.subr.mxu0 0.0
    %771 = vmatpush1.msra.mxu0 %v78
    %772 = vmatprep.subr.mxu0 0.0
    %773 = vmatpush2.msra.mxu0 0.0
    %774 = vmatprep.subr.mxu0 0.0
    %775 = vmatpush2.msra.mxu0 0.0
    %776 = vmatprep.subr.mxu0 0.0
    %777 = vmatpush2.msra.mxu0 0.0
    %778 = vmatprep.subr.mxu0 0.0
    %779 = vmatpush2.msra.mxu0 0.0
    %780 = vmatprep.subr.mxu0 0.0
    %781 = vmatpush2.msra.mxu0 0.0
    %782 = vmatprep.subr.mxu0 0.0
    %783 = vmatpush2.msra.mxu0 0.0
    %784 = vmatprep.subr.mxu0 0.0
    %785 = vmatpush2.msra.mxu0 0.0
    %786 = vmatprep.subr.mxu0 0.0
    %787 = vmatpush2.msra.mxu0 0.0
    %788 = vmatprep.subr.mxu0 0.0
    %789 = vmatpush2.msra.mxu0 0.0
    %790 = vmatprep.subr.mxu0 0.0
    %791 = vmatpush2.msra.mxu0 0.0
    %792 = vmatprep.subr.mxu0 0.0
    %793 = vmatpush2.msra.mxu0 0.0
    %794 = vmatprep.subr.mxu0 0.0
    %795 = vmatpush2.msra.mxu0 0.0
    %796 = vmatprep.subr.mxu0 0.0
    %797 = vmatpush2.msra.mxu0 0.0
    %798 = vmatprep.subr.mxu0 0.0
    %799 = vmatpush2.msra.mxu0 0.0
    %800 = vmatprep.subr.mxu0 0.0
    %801 = vmatpush2.msra.mxu0 0.0
    %802 = vmatprep.subr.mxu0 0.0
    %803 = vmatpush2.msra.mxu0 0.0
    %804 = vmatprep.mubr.f32.mxu0 0.0
    %805 = vmatmul.mubr.f32.gmra.mxu0 %v586
    %v806 = vpop.f32.mrf.mxu0
    %v807 = vadd.f32 0.0, %v806
    %v808 = vpop.f32.mrf.mxu0
    %809 = vmatprep.mubr.f32.mxu0 0.0
    %810 = vmatmul.mubr.f32.gmra.mxu0 %v587
    %v811 = vpop.f32.mrf.mxu0
    %v812 = vadd.f32 0.0, %v811
    %v813 = vpop.f32.mrf.mxu0
    %814 = vdwg.mxu0
    %815 = vmatprep.subr.mxu0 0.0
    %816 = vmatpush1.msra.mxu0 %v109
    %817 = vmatprep.subr.mxu0 0.0
    %818 = vmatpush1.msra.mxu0 %v108
    %819 = vmatprep.subr.mxu0 0.0
    %820 = vmatpush1.msra.mxu0 %v107
    %821 = vmatprep.subr.mxu0 0.0
    %822 = vmatpush1.msra.mxu0 %v106
    %823 = vmatprep.subr.mxu0 0.0
    %824 = vmatpush1.msra.mxu0 %v105
    %825 = vmatprep.subr.mxu0 0.0
    %826 = vmatpush1.msra.mxu0 %v104
    %827 = vmatprep.subr.mxu0 0.0
    %828 = vmatpush1.msra.mxu0 %v103
    %829 = vmatprep.subr.mxu0 0.0
    %830 = vmatpush1.msra.mxu0 %v102
    %831 = vmatprep.subr.mxu0 0.0
    %832 = vmatpush1.msra.mxu0 %v101
    %833 = vmatprep.subr.mxu0 0.0
    %834 = vmatpush1.msra.mxu0 %v100
    %835 = vmatprep.subr.mxu0 0.0
    %836 = vmatpush1.msra.mxu0 %v99
    %837 = vmatprep.subr.mxu0 0.0
    %838 = vmatpush1.msra.mxu0 %v98
    %839 = vmatprep.subr.mxu0 0.0
    %840 = vmatpush1.msra.mxu0 %v97
    %841 = vmatprep.subr.mxu0 0.0
    %842 = vmatpush1.msra.mxu0 %v96
    %843 = vmatprep.subr.mxu0 0.0
    %844 = vmatpush1.msra.mxu0 %v95
    %845 = vmatprep.subr.mxu0 0.0
    %846 = vmatpush1.msra.mxu0 %v94
    %847 = vmatprep.subr.mxu0 0.0
    %848 = vmatpush2.msra.mxu0 0.0
    %849 = vmatprep.subr.mxu0 0.0
    %850 = vmatpush2.msra.mxu0 0.0
    %851 = vmatprep.subr.mxu0 0.0
    %852 = vmatpush2.msra.mxu0 0.0
    %853 = vmatprep.subr.mxu0 0.0
    %854 = vmatpush2.msra.mxu0 0.0
    %855 = vmatprep.subr.mxu0 0.0
    %856 = vmatpush2.msra.mxu0 0.0
    %857 = vmatprep.subr.mxu0 0.0
    %858 = vmatpush2.msra.mxu0 0.0
    %859 = vmatprep.subr.mxu0 0.0
    %860 = vmatpush2.msra.mxu0 0.0
    %861 = vmatprep.subr.mxu0 0.0
    %862 = vmatpush2.msra.mxu0 0.0
    %863 = vmatprep.subr.mxu0 0.0
    %864 = vmatpush2.msra.mxu0 0.0
    %865 = vmatprep.subr.mxu0 0.0
    %866 = vmatpush2.msra.mxu0 0.0
    %867 = vmatprep.subr.mxu0 0.0
    %868 = vmatpush2.msra.mxu0 0.0
    %869 = vmatprep.subr.mxu0 0.0
    %870 = vmatpush2.msra.mxu0 0.0
    %871 = vmatprep.subr.mxu0 0.0
    %872 = vmatpush2.msra.mxu0 0.0
    %873 = vmatprep.subr.mxu0 0.0
    %874 = vmatpush2.msra.mxu0 0.0
    %875 = vmatprep.subr.mxu0 0.0
    %876 = vmatpush2.msra.mxu0 0.0
    %877 = vmatprep.subr.mxu0 0.0
    %878 = vmatpush2.msra.mxu0 0.0
    %879 = vmatprep.mubr.f32.mxu0 0.0
    %880 = vmatmul.mubr.f32.gmra.mxu0 %v584
    %v881 = vpop.f32.mrf.mxu0
    %v882 = vadd.f32 %v807, %v881
    %v883 = vpop.f32.mrf.mxu0
    %884 = vmatprep.mubr.f32.mxu0 0.0
    %885 = vmatmul.mubr.f32.gmra.mxu0 %v585
    %v886 = vpop.f32.mrf.mxu0
    %v887 = vadd.f32 %v812, %v886
    %v888 = vpop.f32.mrf.mxu0
    %889 = vdwg.mxu0
    %v891 = vsel %vm110, %v42, 0
    %v894 = vsel %vm110, %v43, 0
    %896 = vmatprep.subr.mxu0 0.0
    %897 = vmatpush1.msra.mxu0 0.0
    %898 = vmatprep.subr.mxu0 0.0
    %899 = vmatpush1.msra.mxu0 0.0
    %900 = vmatprep.subr.mxu0 0.0
    %901 = vmatpush1.msra.mxu0 0.0
    %902 = vmatprep.subr.mxu0 0.0
    %903 = vmatpush1.msra.mxu0 0.0
    %904 = vmatprep.subr.mxu0 0.0
    %905 = vmatpush1.msra.mxu0 0.0
    %906 = vmatprep.subr.mxu0 0.0
    %907 = vmatpush1.msra.mxu0 0.0
    %908 = vmatprep.subr.mxu0 0.0
    %909 = vmatpush1.msra.mxu0 0.0
    %910 = vmatprep.subr.mxu0 0.0
    %911 = vmatpush1.msra.mxu0 0.0
    %912 = vmatprep.subr.mxu0 0.0
    %913 = vmatpush1.msra.mxu0 0.0
    %914 = vmatprep.subr.mxu0 0.0
    %915 = vmatpush1.msra.mxu0 0.0
    %916 = vmatprep.subr.mxu0 0.0
    %917 = vmatpush1.msra.mxu0 0.0
    %918 = vmatprep.subr.mxu0 0.0
    %919 = vmatpush1.msra.mxu0 0.0
    %920 = vmatprep.subr.mxu0 0.0
    %921 = vmatpush1.msra.mxu0 0.0
    %922 = vmatprep.subr.mxu0 0.0
    %923 = vmatpush1.msra.mxu0 0.0
    %924 = vmatprep.subr.mxu0 0.0
    %925 = vmatpush1.msra.mxu0 %v739
    %926 = vmatprep.subr.mxu0 0.0
    %927 = vmatpush1.msra.mxu0 %v738
    %928 = vmatprep.subr.mxu0 0.0
    %929 = vmatpush2.msra.mxu0 0.0
    %930 = vmatprep.subr.mxu0 0.0
    %931 = vmatpush2.msra.mxu0 0.0
    %932 = vmatprep.subr.mxu0 0.0
    %933 = vmatpush2.msra.mxu0 0.0
    %934 = vmatprep.subr.mxu0 0.0
    %935 = vmatpush2.msra.mxu0 0.0
    %936 = vmatprep.subr.mxu0 0.0
    %937 = vmatpush2.msra.mxu0 0.0
    %938 = vmatprep.subr.mxu0 0.0
    %939 = vmatpush2.msra.mxu0 0.0
    %940 = vmatprep.subr.mxu0 0.0
    %941 = vmatpush2.msra.mxu0 0.0
    %942 = vmatprep.subr.mxu0 0.0
    %943 = vmatpush2.msra.mxu0 0.0
    %944 = vmatprep.subr.mxu0 0.0
    %945 = vmatpush2.msra.mxu0 0.0
    %946 = vmatprep.subr.mxu0 0.0
    %947 = vmatpush2.msra.mxu0 0.0
    %948 = vmatprep.subr.mxu0 0.0
    %949 = vmatpush2.msra.mxu0 0.0
    %950 = vmatprep.subr.mxu0 0.0
    %951 = vmatpush2.msra.mxu0 0.0
    %952 = vmatprep.subr.mxu0 0.0
    %953 = vmatpush2.msra.mxu0 0.0
    %954 = vmatprep.subr.mxu0 0.0
    %955 = vmatpush2.msra.mxu0 0.0
    %956 = vmatprep.subr.mxu0 0.0
    %957 = vmatpush2.msra.mxu0 0.0
    %958 = vmatprep.subr.mxu0 0.0
    %959 = vmatpush2.msra.mxu0 0.0
    %960 = vmatprep.mubr.f32.mxu0 0.0
    %961 = vmatmul.mubr.f32.gmra.mxu0 %v891
    %v962 = vpop.f32.mrf.mxu0
    %v963 = vadd.f32 0.0, %v962
    %v964 = vpop.f32.mrf.mxu0
    %965 = vmatprep.mubr.f32.mxu0 0.0
    %966 = vmatmul.mubr.f32.gmra.mxu0 %v894
    %v967 = vpop.f32.mrf.mxu0
    %v968 = vadd.f32 0.0, %v967
    %v969 = vpop.f32.mrf.mxu0
    %970 = vdwg.mxu0
    %v972 = vsel %vm110, %v44, 0
    %v975 = vsel %vm110, %v45, 0
    %977 = vmatprep.subr.mxu0 0.0
    %978 = vmatpush1.msra.mxu0 0.0
    %979 = vmatprep.subr.mxu0 0.0
    %980 = vmatpush1.msra.mxu0 0.0
    %981 = vmatprep.subr.mxu0 0.0
    %982 = vmatpush1.msra.mxu0 0.0
    %983 = vmatprep.subr.mxu0 0.0
    %984 = vmatpush1.msra.mxu0 0.0
    %985 = vmatprep.subr.mxu0 0.0
    %986 = vmatpush1.msra.mxu0 0.0
    %987 = vmatprep.subr.mxu0 0.0
    %988 = vmatpush1.msra.mxu0 0.0
    %989 = vmatprep.subr.mxu0 0.0
    %990 = vmatpush1.msra.mxu0 0.0
    %991 = vmatprep.subr.mxu0 0.0
    %992 = vmatpush1.msra.mxu0 0.0
    %993 = vmatprep.subr.mxu0 0.0
    %994 = vmatpush1.msra.mxu0 0.0
    %995 = vmatprep.subr.mxu0 0.0
    %996 = vmatpush1.msra.mxu0 0.0
    %997 = vmatprep.subr.mxu0 0.0
    %998 = vmatpush1.msra.mxu0 0.0
    %999 = vmatprep.subr.mxu0 0.0
    %1000 = vmatpush1.msra.mxu0 0.0
    %1001 = vmatprep.subr.mxu0 0.0
    %1002 = vmatpush1.msra.mxu0 0.0
    %1003 = vmatprep.subr.mxu0 0.0
    %1004 = vmatpush1.msra.mxu0 0.0
    %1005 = vmatprep.subr.mxu0 0.0
    %1006 = vmatpush1.msra.mxu0 %v887
    %1007 = vmatprep.subr.mxu0 0.0
    %1008 = vmatpush1.msra.mxu0 %v882
    %1009 = vmatprep.subr.mxu0 0.0
    %1010 = vmatpush2.msra.mxu0 0.0
    %1011 = vmatprep.subr.mxu0 0.0
    %1012 = vmatpush2.msra.mxu0 0.0
    %1013 = vmatprep.subr.mxu0 0.0
    %1014 = vmatpush2.msra.mxu0 0.0
    %1015 = vmatprep.subr.mxu0 0.0
    %1016 = vmatpush2.msra.mxu0 0.0
    %1017 = vmatprep.subr.mxu0 0.0
    %1018 = vmatpush2.msra.mxu0 0.0
    %1019 = vmatprep.subr.mxu0 0.0
    %1020 = vmatpush2.msra.mxu0 0.0
    %1021 = vmatprep.subr.mxu0 0.0
    %1022 = vmatpush2.msra.mxu0 0.0
    %1023 = vmatprep.subr.mxu0 0.0
    %1024 = vmatpush2.msra.mxu0 0.0
    %1025 = vmatprep.subr.mxu0 0.0
    %1026 = vmatpush2.msra.mxu0 0.0
    %1027 = vmatprep.subr.mxu0 0.0
    %1028 = vmatpush2.msra.mxu0 0.0
    %1029 = vmatprep.subr.mxu0 0.0
    %1030 = vmatpush2.msra.mxu0 0.0
    %1031 = vmatprep.subr.mxu0 0.0
    %1032 = vmatpush2.msra.mxu0 0.0
    %1033 = vmatprep.subr.mxu0 0.0
    %1034 = vmatpush2.msra.mxu0 0.0
    %1035 = vmatprep.subr.mxu0 0.0
    %1036 = vmatpush2.msra.mxu0 0.0
    %1037 = vmatprep.subr.mxu0 0.0
    %1038 = vmatpush2.msra.mxu0 0.0
    %1039 = vmatprep.subr.mxu0 0.0
    %1040 = vmatpush2.msra.mxu0 0.0
    %1041 = vmatprep.mubr.f32.mxu0 0.0
    %1042 = vmatmul.mubr.f32.gmra.mxu0 %v972
    %v1043 = vpop.f32.mrf.mxu0
    %v1044 = vadd.f32 0.0, %v1043
    %v1045 = vpop.f32.mrf.mxu0
    %1046 = vmatprep.mubr.f32.mxu0 0.0
    %1047 = vmatmul.mubr.f32.gmra.mxu0 %v975
    %v1048 = vpop.f32.mrf.mxu0
    %v1049 = vadd.f32 0.0, %v1048
    %v1050 = vpop.f32.mrf.mxu0
    %1051 = vdwg.mxu0
    %v1052 = vsub.f32 %v963, %v1044
    %v1053 = vsub.f32 %v968, %v1049
    %1054 = vmatprep.subr.mxu0 0.0
    %1055 = vmatpush1.msra.mxu0 0.0
    %1056 = vmatprep.subr.mxu0 0.0
    %1057 = vmatpush1.msra.mxu0 0.0
    %1058 = vmatprep.subr.mxu0 0.0
    %1059 = vmatpush1.msra.mxu0 0.0
    %1060 = vmatprep.subr.mxu0 0.0
    %1061 = vmatpush1.msra.mxu0 0.0
    %1062 = vmatprep.subr.mxu0 0.0
    %1063 = vmatpush1.msra.mxu0 0.0
    %1064 = vmatprep.subr.mxu0 0.0
    %1065 = vmatpush1.msra.mxu0 0.0
    %1066 = vmatprep.subr.mxu0 0.0
    %1067 = vmatpush1.msra.mxu0 0.0
    %1068 = vmatprep.subr.mxu0 0.0
    %1069 = vmatpush1.msra.mxu0 0.0
    %1070 = vmatprep.subr.mxu0 0.0
    %1071 = vmatpush1.msra.mxu0 0.0
    %1072 = vmatprep.subr.mxu0 0.0
    %1073 = vmatpush1.msra.mxu0 0.0
    %1074 = vmatprep.subr.mxu0 0.0
    %1075 = vmatpush1.msra.mxu0 0.0
    %1076 = vmatprep.subr.mxu0 0.0
    %1077 = vmatpush1.msra.mxu0 0.0
    %1078 = vmatprep.subr.mxu0 0.0
    %1079 = vmatpush1.msra.mxu0 0.0
    %1080 = vmatprep.subr.mxu0 0.0
    %1081 = vmatpush1.msra.mxu0 0.0
    %1082 = vmatprep.subr.mxu0 0.0
    %1083 = vmatpush1.msra.mxu0 %v739
    %1084 = vmatprep.subr.mxu0 0.0
    %1085 = vmatpush1.msra.mxu0 %v738
    %1086 = vmatprep.subr.mxu0 0.0
    %1087 = vmatpush2.msra.mxu0 0.0
    %1088 = vmatprep.subr.mxu0 0.0
    %1089 = vmatpush2.msra.mxu0 0.0
    %1090 = vmatprep.subr.mxu0 0.0
    %1091 = vmatpush2.msra.mxu0 0.0
    %1092 = vmatprep.subr.mxu0 0.0
    %1093 = vmatpush2.msra.mxu0 0.0
    %1094 = vmatprep.subr.mxu0 0.0
    %1095 = vmatpush2.msra.mxu0 0.0
    %1096 = vmatprep.subr.mxu0 0.0
    %1097 = vmatpush2.msra.mxu0 0.0
    %1098 = vmatprep.subr.mxu0 0.0
    %1099 = vmatpush2.msra.mxu0 0.0
    %1100 = vmatprep.subr.mxu0 0.0
    %1101 = vmatpush2.msra.mxu0 0.0
    %1102 = vmatprep.subr.mxu0 0.0
    %1103 = vmatpush2.msra.mxu0 0.0
    %1104 = vmatprep.subr.mxu0 0.0
    %1105 = vmatpush2.msra.mxu0 0.0
    %1106 = vmatprep.subr.mxu0 0.0
    %1107 = vmatpush2.msra.mxu0 0.0
    %1108 = vmatprep.subr.mxu0 0.0
    %1109 = vmatpush2.msra.mxu0 0.0
    %1110 = vmatprep.subr.mxu0 0.0
    %1111 = vmatpush2.msra.mxu0 0.0
    %1112 = vmatprep.subr.mxu0 0.0
    %1113 = vmatpush2.msra.mxu0 0.0
    %1114 = vmatprep.subr.mxu0 0.0
    %1115 = vmatpush2.msra.mxu0 0.0
    %1116 = vmatprep.subr.mxu0 0.0
    %1117 = vmatpush2.msra.mxu0 0.0
    %1118 = vmatprep.mubr.f32.mxu0 0.0
    %1119 = vmatmul.mubr.f32.gmra.mxu0 %v972
    %v1120 = vpop.f32.mrf.mxu0
    %v1121 = vadd.f32 0.0, %v1120
    %v1122 = vpop.f32.mrf.mxu0
    %1123 = vmatprep.mubr.f32.mxu0 0.0
    %1124 = vmatmul.mubr.f32.gmra.mxu0 %v975
    %v1125 = vpop.f32.mrf.mxu0
    %v1126 = vadd.f32 0.0, %v1125
    %v1127 = vpop.f32.mrf.mxu0
    %1128 = vdwg.mxu0
    %1129 = vmatprep.subr.mxu0 0.0
    %1130 = vmatpush1.msra.mxu0 0.0
    %1131 = vmatprep.subr.mxu0 0.0
    %1132 = vmatpush1.msra.mxu0 0.0
    %1133 = vmatprep.subr.mxu0 0.0
    %1134 = vmatpush1.msra.mxu0 0.0
    %1135 = vmatprep.subr.mxu0 0.0
    %1136 = vmatpush1.msra.mxu0 0.0
    %1137 = vmatprep.subr.mxu0 0.0
    %1138 = vmatpush1.msra.mxu0 0.0
    %1139 = vmatprep.subr.mxu0 0.0
    %1140 = vmatpush1.msra.mxu0 0.0
    %1141 = vmatprep.subr.mxu0 0.0
    %1142 = vmatpush1.msra.mxu0 0.0
    %1143 = vmatprep.subr.mxu0 0.0
    %1144 = vmatpush1.msra.mxu0 0.0
    %1145 = vmatprep.subr.mxu0 0.0
    %1146 = vmatpush1.msra.mxu0 0.0
    %1147 = vmatprep.subr.mxu0 0.0
    %1148 = vmatpush1.msra.mxu0 0.0
    %1149 = vmatprep.subr.mxu0 0.0
    %1150 = vmatpush1.msra.mxu0 0.0
    %1151 = vmatprep.subr.mxu0 0.0
    %1152 = vmatpush1.msra.mxu0 0.0
    %1153 = vmatprep.subr.mxu0 0.0
    %1154 = vmatpush1.msra.mxu0 0.0
    %1155 = vmatprep.subr.mxu0 0.0
    %1156 = vmatpush1.msra.mxu0 0.0
    %1157 = vmatprep.subr.mxu0 0.0
    %1158 = vmatpush1.msra.mxu0 %v887
    %1159 = vmatprep.subr.mxu0 0.0
    %1160 = vmatpush1.msra.mxu0 %v882
    %1161 = vmatprep.subr.mxu0 0.0
    %1162 = vmatpush2.msra.mxu0 0.0
    %1163 = vmatprep.subr.mxu0 0.0
    %1164 = vmatpush2.msra.mxu0 0.0
    %1165 = vmatprep.subr.mxu0 0.0
    %1166 = vmatpush2.msra.mxu0 0.0
    %1167 = vmatprep.subr.mxu0 0.0
    %1168 = vmatpush2.msra.mxu0 0.0
    %1169 = vmatprep.subr.mxu0 0.0
    %1170 = vmatpush2.msra.mxu0 0.0
    %1171 = vmatprep.subr.mxu0 0.0
    %1172 = vmatpush2.msra.mxu0 0.0
    %1173 = vmatprep.subr.mxu0 0.0
    %1174 = vmatpush2.msra.mxu0 0.0
    %1175 = vmatprep.subr.mxu0 0.0
    %1176 = vmatpush2.msra.mxu0 0.0
    %1177 = vmatprep.subr.mxu0 0.0
    %1178 = vmatpush2.msra.mxu0 0.0
    %1179 = vmatprep.subr.mxu0 0.0
    %1180 = vmatpush2.msra.mxu0 0.0
    %1181 = vmatprep.subr.mxu0 0.0
    %1182 = vmatpush2.msra.mxu0 0.0
    %1183 = vmatprep.subr.mxu0 0.0
    %1184 = vmatpush2.msra.mxu0 0.0
    %1185 = vmatprep.subr.mxu0 0.0
    %1186 = vmatpush2.msra.mxu0 0.0
    %1187 = vmatprep.subr.mxu0 0.0
    %1188 = vmatpush2.msra.mxu0 0.0
    %1189 = vmatprep.subr.mxu0 0.0
    %1190 = vmatpush2.msra.mxu0 0.0
    %1191 = vmatprep.subr.mxu0 0.0
    %1192 = vmatpush2.msra.mxu0 0.0
    %1193 = vmatprep.mubr.f32.mxu0 0.0
    %1194 = vmatmul.mubr.f32.gmra.mxu0 %v891
    %v1195 = vpop.f32.mrf.mxu0
    %v1196 = vadd.f32 %v1121, %v1195
    %v1197 = vpop.f32.mrf.mxu0
    %1198 = vmatprep.mubr.f32.mxu0 0.0
    %1199 = vmatmul.mubr.f32.gmra.mxu0 %v894
    %v1200 = vpop.f32.mrf.mxu0
    %v1201 = vadd.f32 %v1126, %v1200
    %v1202 = vpop.f32.mrf.mxu0
    %1203 = vdwg.mxu0
    %v1204 = vmul.f32 %v1052, %v1052
    %v1205 = vmul.f32 %v1053, %v1053
    %v1206 = vmul.f32 %v1196, %v1196
    %v1207 = vmul.f32 %v1201, %v1201
    %v1208 = vadd.f32 %v1204, %v1206
    %v1209 = vadd.f32 %v1205, %v1207
    %v1210 = vrsqrt.pop %v1208
    %v1211 = vmul.f32 %v1208, %v1210
    %vm1212 = vcmp.eq.f32.partialorder %v1208, inf
    %v1213 = vsel %vm1212, %v1208, %v1211
    %vm1214 = vcmp.eq.f32.partialorder %v1208, 0.0
    %v1215 = vand.u32 %v1208, 2147483648
    %v1216 = vsel %vm1214, %v1215, %v1213
    %v1217 = vrsqrt.pop %v1209
    %v1218 = vmul.f32 %v1209, %v1217
    %vm1219 = vcmp.eq.f32.partialorder %v1209, inf
    %v1220 = vsel %vm1219, %v1209, %v1218
    %vm1221 = vcmp.eq.f32.partialorder %v1209, 0.0
    %v1222 = vand.u32 %v1209, 2147483648
    %v1223 = vsel %vm1221, %v1222, %v1220
    %1224 = vst [vmem:[#allocation5] sm:$0xff] %v1216
    %1225 = vst [vmem:[#allocation5 + $0x8] sm:$0xff] %v1223
    // Predicated region
    $region22: #{tpu_custom_call.1} parent=1 // pred_check
      _
    $region23: #{tpu_custom_call.1} parent=1 // pred_check_branch
      %1227 = sbr.rel (0) target = $region25
    $region24: #{tpu_custom_call.1} parent=1 // pred_region
      %s1229 = ssub.s32 256, 256
      %1230 = vsyncadd [#allocation4], %s1229
      %s1231 = sshll.u32 [#allocation5], 4
      %s1232 = int_to_ptr.vmem [resolvable:$true] %s1231
      %1237 = dma.vmem_to_hbm [thread:$0]  %s1232, 256, %s4, [#allocation4], 128, 128, 8
    $region25: #{tpu_custom_call.1} parent=1 // pred_fallthru
      _
    // Predicated region
    $region26: #{tpu_custom_call.1} parent=1 // pred_check
      _
    $region27: #{tpu_custom_call.1} parent=1 // pred_check_branch
      %1239 = sbr.rel (0) target = $region29
    $region28: #{tpu_custom_call.1} parent=1 // pred_region
      %s1241 = ssub.s32 256, 256
      %1242 = vsyncadd [#allocation7], %s1241
      %s1243 = sshll.u32 [#allocation6], 4
      %s1244 = int_to_ptr.vmem [resolvable:$true] %s1243
      %1249 = dma.vmem_to_hbm [thread:$0]  %s1244, 256, %s5, [#allocation7], 128, 128, 8
    $region29: #{tpu_custom_call.1} parent=1 // pred_fallthru
      _
    // Predicated region
    $region30: #{tpu_custom_call.1} parent=1 // pred_check
      _
    $region31: #{tpu_custom_call.1} parent=1 // pred_check_branch
      %1251 = sbr.rel (0) target = $region33
    $region32: #{tpu_custom_call.1} parent=1 // pred_region
      %s1253 = ssub.s32 256, 256
      %1254 = vsyncadd [#allocation7], %s1253
      %s1255 = sshll.u32 [#allocation8], 4
      %s1256 = int_to_ptr.vmem [resolvable:$true] %s1255
      %1261 = dma.vmem_to_hbm [thread:$0]  %s1256, 256, %s6, [#allocation7], 128, 128, 8
    $region33: #{tpu_custom_call.1} parent=1 // pred_fallthru
      _
    // Predicated region
    $region34: #{tpu_custom_call.1} parent=1 // pred_check
      _
    $region35: #{tpu_custom_call.1} parent=1 // pred_check_branch
      %1263 = sbr.rel (0) target = $region37
    $region36: #{tpu_custom_call.1} parent=1 // pred_region
      %1264 = dma.done [#allocation4], 256
    $region37: #{tpu_custom_call.1} parent=1 // pred_fallthru
      _
    // Predicated region
    $region38: #{tpu_custom_call.1} parent=1 // pred_check
      _
    $region39: #{tpu_custom_call.1} parent=1 // pred_check_branch
      %1266 = sbr.rel (0) target = $region41
    $region40: #{tpu_custom_call.1} parent=1 // pred_region
      %1267 = dma.done [#allocation7], 256
    $region41: #{tpu_custom_call.1} parent=1 // pred_fallthru
      _
    // Predicated region
    $region42: #{tpu_custom_call.1} parent=1 // pred_check
      _
    $region43: #{tpu_custom_call.1} parent=1 // pred_check_branch
      %1269 = sbr.rel (0) target = $region45
    $region44: #{tpu_custom_call.1} parent=1 // pred_region
      %1270 = dma.done [#allocation7], 256
    $region45: #{tpu_custom_call.1} parent=1 // pred_fallthru
      _
    %1271 = vsyncpa [#allocation3], 1
    %1272 = vsyncpa [#allocation4], 1
    %1273 = vsyncpa [#allocation7], 1

</llo_original>
